<compile_context>
chip_gen: v5e
topology: v5e:2x2
jax: 0.10.0
libtpu: 0.0.40
codegen_flags: <defaults>
</compile_context>

<pallas_src>
import math

import jax
import jax.numpy as jnp
from jax import lax
from jax.experimental import pallas as pl
from jax.experimental.pallas import tpu as pltpu

# ---------------------------------------------------------------- config ----
VOCAB = 128
MAX_POS = 64
HIDDEN = 32
N_HEADS = 2
HEAD_DIM = HIDDEN // N_HEADS
INTERMEDIATE = 64
N_LAYERS = 2
N_CLASSES = 3
LN_EPS = 1e-12
NEG_INF = -1e9  # TODO(synk): HF uses dtype-min/-10000; only differs for fully-masked rows.

_VMEM = pl.BlockSpec(memory_space=pltpu.MemorySpace.VMEM)


# ------------------------------------------------------------- helpers ------
def _layernorm(x, gamma, beta):
    # var = E[x^2] - mu^2 : the two lane reductions are independent, so they
    # can co-issue on the XLU units instead of serializing mu->(x-mu)^2->sum.
    mu = jnp.mean(x, axis=-1, keepdims=True)
    var = jnp.mean(x * x, axis=-1, keepdims=True) - mu * mu
    return (x - mu) * lax.rsqrt(var + LN_EPS) * gamma + beta


def _gelu(x):
    # TODO(synk): HF BERT default is exact erf GELU; tanh approx drifts slightly.
    c = math.sqrt(2.0 / math.pi)
    return 0.5 * x * (1.0 + jnp.tanh(c * (x + 0.044715 * x * x * x)))


# -------------------------------------------------------- fused kernel ------
def _make_kernel(B, S):
    """Whole BERT forward: one-hot embed -> LN -> encoder layers -> classifier."""
    BS = B * S
    H = HIDDEN

    def kernel(ids_ref, amask_ref, wemb_ref, pemb_ref, temb_ref,
               embg_ref, embb_ref,
               wqkv_ref, bqkv_ref, wo_ref, bo_ref, ln1g_ref, ln1b_ref,
               wi_ref, bi_ref, wo2_ref, bo2_ref, ln2g_ref, ln2b_ref,
               clsw_ref, clsb_ref, out_ref):
        f32 = jnp.float32

        # ---- word embedding as a one-hot MXU matmul (VOCAB == 128 lanes) ---
        ids = ids_ref[...]                                           # (BS,1) i32
        onehot = (lax.broadcasted_iota(jnp.int32, (BS, VOCAB), 1) == ids
                  ).astype(f32)                                      # (BS,VOCAB)
        we = jnp.dot(onehot, wemb_ref[...], preferred_element_type=f32)

        # ---- + position / token-type embeddings, embedding LayerNorm -------
        emb = (we.reshape(B, S, H)
               + pemb_ref[0:S, :][None, :, :]        # static slice of pos table
               + temb_ref[0:1, :][None, :, :])       # token_type_ids == 0
        x = _layernorm(emb.reshape(BS, H), embg_ref[...], embb_ref[...])

        # ---- additive attention mask, built in-kernel -----------------------
        # Batch is folded into the row axis, so the (BS,BS) mask is block-
        # diagonal over batches and NEG_INF on padded key columns. Float
        # floor-div keeps the batch-id math on plain VPU ops.
        ri = lax.broadcasted_iota(jnp.int32, (BS, BS), 0).astype(f32)
        ci = lax.broadcasted_iota(jnp.int32, (BS, BS), 1).astype(f32)
        inv_s = 1.0 / float(S)
        same_batch = jnp.floor(ri * inv_s) == jnp.floor(ci * inv_s)
        key_valid = amask_ref[...] > 0.5                             # (1, BS)
        addmask = jnp.where(jnp.logical_and(same_batch, key_valid), 0.0, NEG_INF)

        # ---- encoder layers (static unroll) ---------------------------------
        x_cls = None
        for l in range(N_LAYERS):
            # fused Q|K|V projection: one (BS,H)@(H,3H) MXU dispatch
            qkv = (jnp.dot(x, wqkv_ref[l], preferred_element_type=f32)
                   + bqkv_ref[l])                                    # (BS, 3H)

            attn = None
            for h in range(N_HEADS):                                 # tiny static loop
                q_h = qkv[:, h * HEAD_DIM:(h + 1) * HEAD_DIM]
                k_h = qkv[:, H + h * HEAD_DIM:H + (h + 1) * HEAD_DIM]
                v_h = qkv[:, 2 * H + h * HEAD_DIM:2 * H + (h + 1) * HEAD_DIM]
                # scores_h = q_h @ k_h^T : batch folded into rows ⇒ ONE MXU
                # dispatch per head per step instead of one per (batch, head).
                s = lax.dot_general(q_h, k_h, (((1,), (1,)), ((), ())),
                                    preferred_element_type=f32) + addmask
                m = jnp.max(s, axis=-1, keepdims=True)
                p = jnp.exp(s - m)
                p = p * pl.reciprocal(jnp.sum(p, axis=-1, keepdims=True),
                                      approx=True)
                ctx = jnp.dot(p, v_h, preferred_element_type=f32)    # (BS, HD)
                # per-head output-projection accumulate (no lane concat)
                part = jnp.dot(ctx, wo_ref[l * N_HEADS + h],
                               preferred_element_type=f32)           # (BS, H)
                attn = part if attn is None else attn + part
            attn = attn + bo_ref[l]

            if l < N_LAYERS - 1:
                x1 = _layernorm(x + attn, ln1g_ref[l], ln1b_ref[l])
                hdn = _gelu(jnp.dot(x1, wi_ref[l], preferred_element_type=f32)
                            + bi_ref[l])
                ffn = (jnp.dot(hdn, wo2_ref[l], preferred_element_type=f32)
                       + bo2_ref[l])
                x = _layernorm(x1 + ffn, ln2g_ref[l], ln2b_ref[l])
            else:
                # Only the [CLS] rows reach the classifier; everything after
                # the attention residual is token-wise, so slice them first
                # and run LN1/FFN/LN2 on (B,H) instead of (B*S,H).
                r_cls = (x + attn).reshape(B, S, H)[:, 0, :]          # (B, H)
                x1 = _layernorm(r_cls, ln1g_ref[l], ln1b_ref[l])
                hdn = _gelu(jnp.dot(x1, wi_ref[l], preferred_element_type=f32)
                            + bi_ref[l])
                ffn = (jnp.dot(hdn, wo2_ref[l], preferred_element_type=f32)
                       + bo2_ref[l])
                x_cls = _layernorm(x1 + ffn, ln2g_ref[l], ln2b_ref[l])

        # ---- [CLS] classifier (dropout p=0.2 is identity at inference) -----
        out_ref[...] = (jnp.dot(x_cls, clsw_ref[...], preferred_element_type=f32)
                        + clsb_ref[...])

    return kernel


# ---------------------------------------------------------- parameters ------
def init_params(key):
    def nrm(k, shape, scale=0.02):
        return (scale * jax.random.normal(k, shape)).astype(jnp.float32)

    keys = iter(jax.random.split(key, 64))
    qk_scale = 1.0 / math.sqrt(HEAD_DIM)

    params = {
        "word_emb": nrm(next(keys), (VOCAB, HIDDEN)),
        "pos_emb": nrm(next(keys), (MAX_POS, HIDDEN)),
        "type_emb": nrm(next(keys), (2, HIDDEN)),
        "emb_ln_g": jnp.ones((1, HIDDEN), jnp.float32),
        "emb_ln_b": jnp.zeros((1, HIDDEN), jnp.float32),
    }

    per_layer = {k: [] for k in
                 ("wqkv", "bqkv", "wo", "bo", "ln1g", "ln1b",
                  "wi", "bi", "wo2", "bo2", "ln2g", "ln2b")}
    for _ in range(N_LAYERS):
        # 1/sqrt(head_dim) folded into the Q columns of the fused QKV weight
        # AND the Q bias (bias is zero here, but scaled anyway so a real
        # checkpoint would stay correct).
        wq = nrm(next(keys), (HIDDEN, HIDDEN)) * qk_scale
        wk = nrm(next(keys), (HIDDEN, HIDDEN))
        wv = nrm(next(keys), (HIDDEN, HIDDEN))
        bq = jnp.zeros((HIDDEN,), jnp.float32) * qk_scale
        bk = jnp.zeros((HIDDEN,), jnp.float32)
        bv = jnp.zeros((HIDDEN,), jnp.float32)
        per_layer["wqkv"].append(jnp.concatenate([wq, wk, wv], axis=1))    # (H,3H)
        per_layer["bqkv"].append(jnp.concatenate([bq, bk, bv])[None, :])   # (1,3H)
        # attention output projection pre-split per head: (NH, HD, H) slabs
        per_layer["wo"].append(
            nrm(next(keys), (HIDDEN, HIDDEN)).reshape(N_HEADS, HEAD_DIM, HIDDEN))
        per_layer["bo"].append(jnp.zeros((1, HIDDEN), jnp.float32))
        per_layer["ln1g"].append(jnp.ones((1, HIDDEN), jnp.float32))
        per_layer["ln1b"].append(jnp.zeros((1, HIDDEN), jnp.float32))
        per_layer["wi"].append(nrm(next(keys), (HIDDEN, INTERMEDIATE)))
        per_layer["bi"].append(jnp.zeros((1, INTERMEDIATE), jnp.float32))
        per_layer["wo2"].append(nrm(next(keys), (INTERMEDIATE, HIDDEN)))
        per_layer["bo2"].append(jnp.zeros((1, HIDDEN), jnp.float32))
        per_layer["ln2g"].append(jnp.ones((1, HIDDEN), jnp.float32))
        per_layer["ln2b"].append(jnp.zeros((1, HIDDEN), jnp.float32))

    for name, vals in per_layer.items():
        params[name] = jnp.stack(vals, axis=0)
    # (L, NH, HD, H) -> (L*NH, HD, H) so the kernel indexes with one int
    params["wo"] = params["wo"].reshape(N_LAYERS * N_HEADS, HEAD_DIM, HIDDEN)

    # nn.Linear(hidden, outputs_num) weight is (C, H); store pre-transposed.
    params["cls_w"] = jnp.transpose(nrm(next(keys), (N_CLASSES, HIDDEN)))
    params["cls_b"] = jnp.zeros((1, N_CLASSES), jnp.float32)
    return params


# -------------------------------------------------------------- forward -----
@jax.jit
def emotion_bert_forward(params, input_ids, attention_mask):
    B, S = input_ids.shape
    # Only glue left outside the kernel: two trivial reshapes/casts of the
    # int inputs into VMEM-friendly vectors (used in vector compares in-kernel).
    ids_col = input_ids.reshape(B * S, 1).astype(jnp.int32)
    amask_row = attention_mask.reshape(1, B * S).astype(jnp.float32)

    kernel_args = (
        ids_col, amask_row,
        params["word_emb"], params["pos_emb"], params["type_emb"],
        params["emb_ln_g"], params["emb_ln_b"],
        params["wqkv"], params["bqkv"], params["wo"], params["bo"],
        params["ln1g"], params["ln1b"],
        params["wi"], params["bi"], params["wo2"], params["bo2"],
        params["ln2g"], params["ln2b"],
        params["cls_w"], params["cls_b"],
    )
    logits = pl.pallas_call(
        _make_kernel(B, S),
        out_shape=jax.ShapeDtypeStruct((B, N_CLASSES), jnp.float32),
        in_specs=[_VMEM] * len(kernel_args),
        out_specs=_VMEM,
    )(*kernel_args)
    return logits


# ----------------------------------------------------------------- main -----
if __name__ == "__main__":
    key = jax.random.PRNGKey(0)
    pkey, ikey = jax.random.split(key)
    params = init_params(pkey)

    B, S = 2, 8
    input_ids = jax.random.randint(ikey, (B, S), 0, VOCAB, dtype=jnp.int32)
    attention_mask = jnp.array(
        [[1, 1, 1, 1, 1, 1, 1, 1],
         [1, 1, 1, 1, 1, 1, 0, 0]], dtype=jnp.int32)

    logits = emotion_bert_forward(params, input_ids, attention_mask)
    jax.block_until_ready(logits)
    assert logits.shape == (B, N_CLASSES)
    assert bool(jnp.all(jnp.isfinite(logits)))
    print("KERNEL_OK")
</pallas_src>

<mosaic_0001>
module attributes {stable_mosaic.version = 11 : i64} {
  func.func @kernel(%arg0: memref<16x1xi32, #tpu.memory_space<vmem>>, %arg1: memref<1x16xf32, #tpu.memory_space<vmem>>, %arg2: memref<128x32xf32, #tpu.memory_space<vmem>>, %arg3: memref<64x32xf32, #tpu.memory_space<vmem>>, %arg4: memref<2x32xf32, #tpu.memory_space<vmem>>, %arg5: memref<1x32xf32, #tpu.memory_space<vmem>>, %arg6: memref<1x32xf32, #tpu.memory_space<vmem>>, %arg7: memref<2x32x96xf32, #tpu.memory_space<vmem>>, %arg8: memref<2x1x96xf32, #tpu.memory_space<vmem>>, %arg9: memref<4x16x32xf32, #tpu.memory_space<vmem>>, %arg10: memref<2x1x32xf32, #tpu.memory_space<vmem>>, %arg11: memref<2x1x32xf32, #tpu.memory_space<vmem>>, %arg12: memref<2x1x32xf32, #tpu.memory_space<vmem>>, %arg13: memref<2x32x64xf32, #tpu.memory_space<vmem>>, %arg14: memref<2x1x64xf32, #tpu.memory_space<vmem>>, %arg15: memref<2x64x32xf32, #tpu.memory_space<vmem>>, %arg16: memref<2x1x32xf32, #tpu.memory_space<vmem>>, %arg17: memref<2x1x32xf32, #tpu.memory_space<vmem>>, %arg18: memref<2x1x32xf32, #tpu.memory_space<vmem>>, %arg19: memref<32x3xf32, #tpu.memory_space<vmem>>, %arg20: memref<1x3xf32, #tpu.memory_space<vmem>>, %arg21: memref<2x3xf32, #tpu.memory_space<vmem>>) attributes {dimension_semantics = [], scalar_prefetch = 0 : i64, scratch_operands = 0 : i64, tpu.core_type = #tpu.core_type<tc>} {
    %c0 = arith.constant 0 : index
    %c0_0 = arith.constant 0 : index
    %0 = vector.load %arg0[%c0, %c0_0] : memref<16x1xi32, #tpu.memory_space<vmem>>, vector<16x1xi32>
    %1 = tpu.iota {dimensions = array<i32: 1>} : vector<16x128xi32>
    %2 = vector.broadcast %0 : vector<16x1xi32> to vector<16x128xi32>
    %3 = arith.cmpi eq, %1, %2 : vector<16x128xi32>
    %4 = arith.extui %3 : vector<16x128xi1> to vector<16x128xi32>
    %5 = arith.sitofp %4 : vector<16x128xi32> to vector<16x128xf32>
    %c0_1 = arith.constant 0 : index
    %c0_2 = arith.constant 0 : index
    %6 = vector.load %arg2[%c0_1, %c0_2] : memref<128x32xf32, #tpu.memory_space<vmem>>, vector<128x32xf32>
    %cst = arith.constant dense<0.000000e+00> : vector<16x32xf32>
    %7 = tpu.matmul %5, %6, %cst {dimension_numbers = #tpu.dot_dimension_numbers<[1], [0], [0], [1], [0, 0, 1, 1], [], []>} : vector<16x128xf32>, vector<128x32xf32>, vector<16x32xf32> -> vector<16x32xf32>
    %8 = vector.shape_cast %7 : vector<16x32xf32> to vector<2x8x32xf32>
    %c0_3 = arith.constant 0 : index
    %c0_4 = arith.constant 0 : index
    %9 = vector.load %arg3[%c0_3, %c0_4] : memref<64x32xf32, #tpu.memory_space<vmem>>, vector<8x32xf32>
    %10 = vector.shape_cast %9 : vector<8x32xf32> to vector<1x8x32xf32>
    %11 = vector.broadcast %10 : vector<1x8x32xf32> to vector<2x8x32xf32>
    %12 = arith.addf %8, %11 : vector<2x8x32xf32>
    %c0_5 = arith.constant 0 : index
    %c0_6 = arith.constant 0 : index
    %13 = vector.load %arg4[%c0_5, %c0_6] : memref<2x32xf32, #tpu.memory_space<vmem>>, vector<1x32xf32>
    %14 = vector.shape_cast %13 : vector<1x32xf32> to vector<1x1x32xf32>
    %15 = vector.broadcast %14 : vector<1x1x32xf32> to vector<2x8x32xf32>
    %16 = arith.addf %12, %15 : vector<2x8x32xf32>
    %17 = vector.shape_cast %16 : vector<2x8x32xf32> to vector<16x32xf32>
    %c0_7 = arith.constant 0 : index
    %c0_8 = arith.constant 0 : index
    %18 = vector.load %arg5[%c0_7, %c0_8] : memref<1x32xf32, #tpu.memory_space<vmem>>, vector<1x32xf32>
    %c0_9 = arith.constant 0 : index
    %c0_10 = arith.constant 0 : index
    %19 = vector.load %arg6[%c0_9, %c0_10] : memref<1x32xf32, #tpu.memory_space<vmem>>, vector<1x32xf32>
    %cst_11 = arith.constant dense<0.000000e+00> : vector<16xf32>
    %20 = vector.multi_reduction <add>, %17, %cst_11 [1] : vector<16x32xf32> to vector<16xf32>
    %21 = vector.shape_cast %20 : vector<16xf32> to vector<16x1xf32>
    %cst_12 = arith.constant 3.200000e+01 : f32
    %22 = vector.broadcast %cst_12 : f32 to vector<16x1xf32>
    %23 = arith.divf %21, %22 : vector<16x1xf32>
    %24 = arith.mulf %17, %17 : vector<16x32xf32>
    %cst_13 = arith.constant dense<0.000000e+00> : vector<16xf32>
    %25 = vector.multi_reduction <add>, %24, %cst_13 [1] : vector<16x32xf32> to vector<16xf32>
    %26 = vector.shape_cast %25 : vector<16xf32> to vector<16x1xf32>
    %cst_14 = arith.constant 3.200000e+01 : f32
    %27 = vector.broadcast %cst_14 : f32 to vector<16x1xf32>
    %28 = arith.divf %26, %27 : vector<16x1xf32>
    %29 = arith.mulf %23, %23 : vector<16x1xf32>
    %30 = arith.subf %28, %29 : vector<16x1xf32>
    %31 = vector.broadcast %23 : vector<16x1xf32> to vector<16x32xf32>
    %32 = arith.subf %17, %31 : vector<16x32xf32>
    %cst_15 = arith.constant 9.99999996E-13 : f32
    %33 = vector.broadcast %cst_15 : f32 to vector<16x1xf32>
    %34 = arith.addf %30, %33 : vector<16x1xf32>
    %35 = math.rsqrt %34 : vector<16x1xf32>
    %36 = vector.broadcast %35 : vector<16x1xf32> to vector<16x32xf32>
    %37 = arith.mulf %32, %36 : vector<16x32xf32>
    %38 = vector.broadcast %18 : vector<1x32xf32> to vector<16x32xf32>
    %39 = arith.mulf %37, %38 : vector<16x32xf32>
    %40 = vector.broadcast %19 : vector<1x32xf32> to vector<16x32xf32>
    %41 = arith.addf %39, %40 : vector<16x32xf32>
    %42 = tpu.iota {dimensions = array<i32: 0>} : vector<16x16xi32>
    %43 = arith.sitofp %42 : vector<16x16xi32> to vector<16x16xf32>
    %44 = tpu.iota {dimensions = array<i32: 1>} : vector<16x16xi32>
    %45 = arith.sitofp %44 : vector<16x16xi32> to vector<16x16xf32>
    %cst_16 = arith.constant 1.250000e-01 : f32
    %46 = vector.broadcast %cst_16 : f32 to vector<16x16xf32>
    %47 = arith.mulf %43, %46 : vector<16x16xf32>
    %48 = math.floor %47 : vector<16x16xf32>
    %cst_17 = arith.constant 1.250000e-01 : f32
    %49 = vector.broadcast %cst_17 : f32 to vector<16x16xf32>
    %50 = arith.mulf %45, %49 : vector<16x16xf32>
    %51 = math.floor %50 : vector<16x16xf32>
    %52 = arith.cmpf oeq, %48, %51 : vector<16x16xf32>
    %c0_18 = arith.constant 0 : index
    %c0_19 = arith.constant 0 : index
    %53 = vector.load %arg1[%c0_18, %c0_19] : memref<1x16xf32, #tpu.memory_space<vmem>>, vector<1x16xf32>
    %cst_20 = arith.constant 5.000000e-01 : f32
    %54 = vector.broadcast %cst_20 : f32 to vector<1x16xf32>
    %55 = arith.cmpf ogt, %53, %54 : vector<1x16xf32>
    %56 = vector.broadcast %55 : vector<1x16xi1> to vector<16x16xi1>
    %57 = arith.andi %52, %56 : vector<16x16xi1>
    %cst_21 = arith.constant 0.000000e+00 : f32
    %cst_22 = arith.constant -1.000000e+09 : f32
    %58 = vector.broadcast %cst_21 : f32 to vector<16x16xf32>
    %59 = vector.broadcast %cst_22 : f32 to vector<16x16xf32>
    %60 = arith.select %57, %58, %59 : vector<16x16xi1>, vector<16x16xf32>
    %c0_23 = arith.constant 0 : index
    %c0_24 = arith.constant 0 : index
    %c0_25 = arith.constant 0 : index
    %61 = vector.load %arg7[%c0_23, %c0_24, %c0_25] : memref<2x32x96xf32, #tpu.memory_space<vmem>>, vector<1x32x96xf32>
    %62 = vector.shape_cast %61 : vector<1x32x96xf32> to vector<32x96xf32>
    %cst_26 = arith.constant dense<0.000000e+00> : vector<16x96xf32>
    %63 = tpu.matmul %41, %62, %cst_26 {dimension_numbers = #tpu.dot_dimension_numbers<[1], [0], [0], [1], [0, 0, 1, 1], [], []>} : vector<16x32xf32>, vector<32x96xf32>, vector<16x96xf32> -> vector<16x96xf32>
    %c0_27 = arith.constant 0 : index
    %c0_28 = arith.constant 0 : index
    %c0_29 = arith.constant 0 : index
    %64 = vector.load %arg8[%c0_27, %c0_28, %c0_29] : memref<2x1x96xf32, #tpu.memory_space<vmem>>, vector<1x1x96xf32>
    %65 = vector.shape_cast %64 : vector<1x1x96xf32> to vector<1x96xf32>
    %66 = vector.broadcast %65 : vector<1x96xf32> to vector<16x96xf32>
    %67 = arith.addf %63, %66 : vector<16x96xf32>
    %68 = vector.extract_strided_slice %67 {offsets = [0, 0], sizes = [16, 16], strides = [1, 1]} : vector<16x96xf32> to vector<16x16xf32>
    %69 = vector.extract_strided_slice %67 {offsets = [0, 32], sizes = [16, 16], strides = [1, 1]} : vector<16x96xf32> to vector<16x16xf32>
    %70 = vector.extract_strided_slice %67 {offsets = [0, 64], sizes = [16, 16], strides = [1, 1]} : vector<16x96xf32> to vector<16x16xf32>
    %cst_30 = arith.constant dense<0.000000e+00> : vector<16x16xf32>
    %71 = tpu.matmul %68, %69, %cst_30 {dimension_numbers = #tpu.dot_dimension_numbers<[1], [1], [0], [0], [0, 0, 1, 0], [], []>} : vector<16x16xf32>, vector<16x16xf32>, vector<16x16xf32> -> vector<16x16xf32>
    %72 = arith.addf %71, %60 : vector<16x16xf32>
    %cst_31 = arith.constant dense<0xFF800000> : vector<16xf32>
    %73 = vector.multi_reduction <maximumf>, %72, %cst_31 [1] : vector<16x16xf32> to vector<16xf32>
    %74 = vector.shape_cast %73 : vector<16xf32> to vector<16x1xf32>
    %75 = vector.broadcast %74 : vector<16x1xf32> to vector<16x16xf32>
    %76 = arith.subf %72, %75 : vector<16x16xf32>
    %77 = math.exp %76 : vector<16x16xf32>
    %cst_32 = arith.constant dense<0.000000e+00> : vector<16xf32>
    %78 = vector.multi_reduction <add>, %77, %cst_32 [1] : vector<16x16xf32> to vector<16xf32>
    %79 = vector.shape_cast %78 : vector<16xf32> to vector<16x1xf32>
    %80 = tpu.reciprocal %79 {approx = true} : vector<16x1xf32> -> vector<16x1xf32>
    %81 = vector.broadcast %80 : vector<16x1xf32> to vector<16x16xf32>
    %82 = arith.mulf %77, %81 : vector<16x16xf32>
    %cst_33 = arith.constant dense<0.000000e+00> : vector<16x16xf32>
    %83 = tpu.matmul %82, %70, %cst_33 {dimension_numbers = #tpu.dot_dimension_numbers<[1], [0], [0], [1], [0, 0, 1, 1], [], []>} : vector<16x16xf32>, vector<16x16xf32>, vector<16x16xf32> -> vector<16x16xf32>
    %c0_34 = arith.constant 0 : index
    %c0_35 = arith.constant 0 : index
    %c0_36 = arith.constant 0 : index
    %84 = vector.load %arg9[%c0_34, %c0_35, %c0_36] : memref<4x16x32xf32, #tpu.memory_space<vmem>>, vector<1x16x32xf32>
    %85 = vector.shape_cast %84 : vector<1x16x32xf32> to vector<16x32xf32>
    %cst_37 = arith.constant dense<0.000000e+00> : vector<16x32xf32>
    %86 = tpu.matmul %83, %85, %cst_37 {dimension_numbers = #tpu.dot_dimension_numbers<[1], [0], [0], [1], [0, 0, 1, 1], [], []>} : vector<16x16xf32>, vector<16x32xf32>, vector<16x32xf32> -> vector<16x32xf32>
    %87 = vector.extract_strided_slice %67 {offsets = [0, 16], sizes = [16, 16], strides = [1, 1]} : vector<16x96xf32> to vector<16x16xf32>
    %88 = vector.extract_strided_slice %67 {offsets = [0, 48], sizes = [16, 16], strides = [1, 1]} : vector<16x96xf32> to vector<16x16xf32>
    %89 = vector.extract_strided_slice %67 {offsets = [0, 80], sizes = [16, 16], strides = [1, 1]} : vector<16x96xf32> to vector<16x16xf32>
    %cst_38 = arith.constant dense<0.000000e+00> : vector<16x16xf32>
    %90 = tpu.matmul %87, %88, %cst_38 {dimension_numbers = #tpu.dot_dimension_numbers<[1], [1], [0], [0], [0, 0, 1, 0], [], []>} : vector<16x16xf32>, vector<16x16xf32>, vector<16x16xf32> -> vector<16x16xf32>
    %91 = arith.addf %90, %60 : vector<16x16xf32>
    %cst_39 = arith.constant dense<0xFF800000> : vector<16xf32>
    %92 = vector.multi_reduction <maximumf>, %91, %cst_39 [1] : vector<16x16xf32> to vector<16xf32>
    %93 = vector.shape_cast %92 : vector<16xf32> to vector<16x1xf32>
    %94 = vector.broadcast %93 : vector<16x1xf32> to vector<16x16xf32>
    %95 = arith.subf %91, %94 : vector<16x16xf32>
    %96 = math.exp %95 : vector<16x16xf32>
    %cst_40 = arith.constant dense<0.000000e+00> : vector<16xf32>
    %97 = vector.multi_reduction <add>, %96, %cst_40 [1] : vector<16x16xf32> to vector<16xf32>
    %98 = vector.shape_cast %97 : vector<16xf32> to vector<16x1xf32>
    %99 = tpu.reciprocal %98 {approx = true} : vector<16x1xf32> -> vector<16x1xf32>
    %100 = vector.broadcast %99 : vector<16x1xf32> to vector<16x16xf32>
    %101 = arith.mulf %96, %100 : vector<16x16xf32>
    %cst_41 = arith.constant dense<0.000000e+00> : vector<16x16xf32>
    %102 = tpu.matmul %101, %89, %cst_41 {dimension_numbers = #tpu.dot_dimension_numbers<[1], [0], [0], [1], [0, 0, 1, 1], [], []>} : vector<16x16xf32>, vector<16x16xf32>, vector<16x16xf32> -> vector<16x16xf32>
    %c1 = arith.constant 1 : index
    %c0_42 = arith.constant 0 : index
    %c0_43 = arith.constant 0 : index
    %103 = vector.load %arg9[%c1, %c0_42, %c0_43] : memref<4x16x32xf32, #tpu.memory_space<vmem>>, vector<1x16x32xf32>
    %104 = vector.shape_cast %103 : vector<1x16x32xf32> to vector<16x32xf32>
    %cst_44 = arith.constant dense<0.000000e+00> : vector<16x32xf32>
    %105 = tpu.matmul %102, %104, %cst_44 {dimension_numbers = #tpu.dot_dimension_numbers<[1], [0], [0], [1], [0, 0, 1, 1], [], []>} : vector<16x16xf32>, vector<16x32xf32>, vector<16x32xf32> -> vector<16x32xf32>
    %106 = arith.addf %86, %105 : vector<16x32xf32>
    %c0_45 = arith.constant 0 : index
    %c0_46 = arith.constant 0 : index
    %c0_47 = arith.constant 0 : index
    %107 = vector.load %arg10[%c0_45, %c0_46, %c0_47] : memref<2x1x32xf32, #tpu.memory_space<vmem>>, vector<1x1x32xf32>
    %108 = vector.shape_cast %107 : vector<1x1x32xf32> to vector<1x32xf32>
    %109 = vector.broadcast %108 : vector<1x32xf32> to vector<16x32xf32>
    %110 = arith.addf %106, %109 : vector<16x32xf32>
    %111 = arith.addf %41, %110 : vector<16x32xf32>
    %c0_48 = arith.constant 0 : index
    %c0_49 = arith.constant 0 : index
    %c0_50 = arith.constant 0 : index
    %112 = vector.load %arg11[%c0_48, %c0_49, %c0_50] : memref<2x1x32xf32, #tpu.memory_space<vmem>>, vector<1x1x32xf32>
    %113 = vector.shape_cast %112 : vector<1x1x32xf32> to vector<1x32xf32>
    %c0_51 = arith.constant 0 : index
    %c0_52 = arith.constant 0 : index
    %c0_53 = arith.constant 0 : index
    %114 = vector.load %arg12[%c0_51, %c0_52, %c0_53] : memref<2x1x32xf32, #tpu.memory_space<vmem>>, vector<1x1x32xf32>
    %115 = vector.shape_cast %114 : vector<1x1x32xf32> to vector<1x32xf32>
    %cst_54 = arith.constant dense<0.000000e+00> : vector<16xf32>
    %116 = vector.multi_reduction <add>, %111, %cst_54 [1] : vector<16x32xf32> to vector<16xf32>
    %117 = vector.shape_cast %116 : vector<16xf32> to vector<16x1xf32>
    %cst_55 = arith.constant 3.200000e+01 : f32
    %118 = vector.broadcast %cst_55 : f32 to vector<16x1xf32>
    %119 = arith.divf %117, %118 : vector<16x1xf32>
    %120 = arith.mulf %111, %111 : vector<16x32xf32>
    %cst_56 = arith.constant dense<0.000000e+00> : vector<16xf32>
    %121 = vector.multi_reduction <add>, %120, %cst_56 [1] : vector<16x32xf32> to vector<16xf32>
    %122 = vector.shape_cast %121 : vector<16xf32> to vector<16x1xf32>
    %cst_57 = arith.constant 3.200000e+01 : f32
    %123 = vector.broadcast %cst_57 : f32 to vector<16x1xf32>
    %124 = arith.divf %122, %123 : vector<16x1xf32>
    %125 = arith.mulf %119, %119 : vector<16x1xf32>
    %126 = arith.subf %124, %125 : vector<16x1xf32>
    %127 = vector.broadcast %119 : vector<16x1xf32> to vector<16x32xf32>
    %128 = arith.subf %111, %127 : vector<16x32xf32>
    %cst_58 = arith.constant 9.99999996E-13 : f32
    %129 = vector.broadcast %cst_58 : f32 to vector<16x1xf32>
    %130 = arith.addf %126, %129 : vector<16x1xf32>
    %131 = math.rsqrt %130 : vector<16x1xf32>
    %132 = vector.broadcast %131 : vector<16x1xf32> to vector<16x32xf32>
    %133 = arith.mulf %128, %132 : vector<16x32xf32>
    %134 = vector.broadcast %113 : vector<1x32xf32> to vector<16x32xf32>
    %135 = arith.mulf %133, %134 : vector<16x32xf32>
    %136 = vector.broadcast %115 : vector<1x32xf32> to vector<16x32xf32>
    %137 = arith.addf %135, %136 : vector<16x32xf32>
    %c0_59 = arith.constant 0 : index
    %c0_60 = arith.constant 0 : index
    %c0_61 = arith.constant 0 : index
    %138 = vector.load %arg13[%c0_59, %c0_60, %c0_61] : memref<2x32x64xf32, #tpu.memory_space<vmem>>, vector<1x32x64xf32>
    %139 = vector.shape_cast %138 : vector<1x32x64xf32> to vector<32x64xf32>
    %cst_62 = arith.constant dense<0.000000e+00> : vector<16x64xf32>
    %140 = tpu.matmul %137, %139, %cst_62 {dimension_numbers = #tpu.dot_dimension_numbers<[1], [0], [0], [1], [0, 0, 1, 1], [], []>} : vector<16x32xf32>, vector<32x64xf32>, vector<16x64xf32> -> vector<16x64xf32>
    %c0_63 = arith.constant 0 : index
    %c0_64 = arith.constant 0 : index
    %c0_65 = arith.constant 0 : index
    %141 = vector.load %arg14[%c0_63, %c0_64, %c0_65] : memref<2x1x64xf32, #tpu.memory_space<vmem>>, vector<1x1x64xf32>
    %142 = vector.shape_cast %141 : vector<1x1x64xf32> to vector<1x64xf32>
    %143 = vector.broadcast %142 : vector<1x64xf32> to vector<16x64xf32>
    %144 = arith.addf %140, %143 : vector<16x64xf32>
    %cst_66 = arith.constant 5.000000e-01 : f32
    %145 = vector.broadcast %cst_66 : f32 to vector<16x64xf32>
    %146 = arith.mulf %145, %144 : vector<16x64xf32>
    %cst_67 = arith.constant 4.471500e-02 : f32
    %147 = vector.broadcast %cst_67 : f32 to vector<16x64xf32>
    %148 = arith.mulf %147, %144 : vector<16x64xf32>
    %149 = arith.mulf %148, %144 : vector<16x64xf32>
    %150 = arith.mulf %149, %144 : vector<16x64xf32>
    %151 = arith.addf %144, %150 : vector<16x64xf32>
    %cst_68 = arith.constant 0.797884583 : f32
    %152 = vector.broadcast %cst_68 : f32 to vector<16x64xf32>
    %153 = arith.mulf %152, %151 : vector<16x64xf32>
    %154 = math.tanh %153 : vector<16x64xf32>
    %cst_69 = arith.constant 1.000000e+00 : f32
    %155 = vector.broadcast %cst_69 : f32 to vector<16x64xf32>
    %156 = arith.addf %155, %154 : vector<16x64xf32>
    %157 = arith.mulf %146, %156 : vector<16x64xf32>
    %c0_70 = arith.constant 0 : index
    %c0_71 = arith.constant 0 : index
    %c0_72 = arith.constant 0 : index
    %158 = vector.load %arg15[%c0_70, %c0_71, %c0_72] : memref<2x64x32xf32, #tpu.memory_space<vmem>>, vector<1x64x32xf32>
    %159 = vector.shape_cast %158 : vector<1x64x32xf32> to vector<64x32xf32>
    %cst_73 = arith.constant dense<0.000000e+00> : vector<16x32xf32>
    %160 = tpu.matmul %157, %159, %cst_73 {dimension_numbers = #tpu.dot_dimension_numbers<[1], [0], [0], [1], [0, 0, 1, 1], [], []>} : vector<16x64xf32>, vector<64x32xf32>, vector<16x32xf32> -> vector<16x32xf32>
    %c0_74 = arith.constant 0 : index
    %c0_75 = arith.constant 0 : index
    %c0_76 = arith.constant 0 : index
    %161 = vector.load %arg16[%c0_74, %c0_75, %c0_76] : memref<2x1x32xf32, #tpu.memory_space<vmem>>, vector<1x1x32xf32>
    %162 = vector.shape_cast %161 : vector<1x1x32xf32> to vector<1x32xf32>
    %163 = vector.broadcast %162 : vector<1x32xf32> to vector<16x32xf32>
    %164 = arith.addf %160, %163 : vector<16x32xf32>
    %165 = arith.addf %137, %164 : vector<16x32xf32>
    %c0_77 = arith.constant 0 : index
    %c0_78 = arith.constant 0 : index
    %c0_79 = arith.constant 0 : index
    %166 = vector.load %arg17[%c0_77, %c0_78, %c0_79] : memref<2x1x32xf32, #tpu.memory_space<vmem>>, vector<1x1x32xf32>
    %167 = vector.shape_cast %166 : vector<1x1x32xf32> to vector<1x32xf32>
    %c0_80 = arith.constant 0 : index
    %c0_81 = arith.constant 0 : index
    %c0_82 = arith.constant 0 : index
    %168 = vector.load %arg18[%c0_80, %c0_81, %c0_82] : memref<2x1x32xf32, #tpu.memory_space<vmem>>, vector<1x1x32xf32>
    %169 = vector.shape_cast %168 : vector<1x1x32xf32> to vector<1x32xf32>
    %cst_83 = arith.constant dense<0.000000e+00> : vector<16xf32>
    %170 = vector.multi_reduction <add>, %165, %cst_83 [1] : vector<16x32xf32> to vector<16xf32>
    %171 = vector.shape_cast %170 : vector<16xf32> to vector<16x1xf32>
    %cst_84 = arith.constant 3.200000e+01 : f32
    %172 = vector.broadcast %cst_84 : f32 to vector<16x1xf32>
    %173 = arith.divf %171, %172 : vector<16x1xf32>
    %174 = arith.mulf %165, %165 : vector<16x32xf32>
    %cst_85 = arith.constant dense<0.000000e+00> : vector<16xf32>
    %175 = vector.multi_reduction <add>, %174, %cst_85 [1] : vector<16x32xf32> to vector<16xf32>
    %176 = vector.shape_cast %175 : vector<16xf32> to vector<16x1xf32>
    %cst_86 = arith.constant 3.200000e+01 : f32
    %177 = vector.broadcast %cst_86 : f32 to vector<16x1xf32>
    %178 = arith.divf %176, %177 : vector<16x1xf32>
    %179 = arith.mulf %173, %173 : vector<16x1xf32>
    %180 = arith.subf %178, %179 : vector<16x1xf32>
    %181 = vector.broadcast %173 : vector<16x1xf32> to vector<16x32xf32>
    %182 = arith.subf %165, %181 : vector<16x32xf32>
    %cst_87 = arith.constant 9.99999996E-13 : f32
    %183 = vector.broadcast %cst_87 : f32 to vector<16x1xf32>
    %184 = arith.addf %180, %183 : vector<16x1xf32>
    %185 = math.rsqrt %184 : vector<16x1xf32>
    %186 = vector.broadcast %185 : vector<16x1xf32> to vector<16x32xf32>
    %187 = arith.mulf %182, %186 : vector<16x32xf32>
    %188 = vector.broadcast %167 : vector<1x32xf32> to vector<16x32xf32>
    %189 = arith.mulf %187, %188 : vector<16x32xf32>
    %190 = vector.broadcast %169 : vector<1x32xf32> to vector<16x32xf32>
    %191 = arith.addf %189, %190 : vector<16x32xf32>
    %c1_88 = arith.constant 1 : index
    %c0_89 = arith.constant 0 : index
    %c0_90 = arith.constant 0 : index
    %192 = vector.load %arg7[%c1_88, %c0_89, %c0_90] : memref<2x32x96xf32, #tpu.memory_space<vmem>>, vector<1x32x96xf32>
    %193 = vector.shape_cast %192 : vector<1x32x96xf32> to vector<32x96xf32>
    %cst_91 = arith.constant dense<0.000000e+00> : vector<16x96xf32>
    %194 = tpu.matmul %191, %193, %cst_91 {dimension_numbers = #tpu.dot_dimension_numbers<[1], [0], [0], [1], [0, 0, 1, 1], [], []>} : vector<16x32xf32>, vector<32x96xf32>, vector<16x96xf32> -> vector<16x96xf32>
    %c1_92 = arith.constant 1 : index
    %c0_93 = arith.constant 0 : index
    %c0_94 = arith.constant 0 : index
    %195 = vector.load %arg8[%c1_92, %c0_93, %c0_94] : memref<2x1x96xf32, #tpu.memory_space<vmem>>, vector<1x1x96xf32>
    %196 = vector.shape_cast %195 : vector<1x1x96xf32> to vector<1x96xf32>
    %197 = vector.broadcast %196 : vector<1x96xf32> to vector<16x96xf32>
    %198 = arith.addf %194, %197 : vector<16x96xf32>
    %199 = vector.extract_strided_slice %198 {offsets = [0, 0], sizes = [16, 16], strides = [1, 1]} : vector<16x96xf32> to vector<16x16xf32>
    %200 = vector.extract_strided_slice %198 {offsets = [0, 32], sizes = [16, 16], strides = [1, 1]} : vector<16x96xf32> to vector<16x16xf32>
    %201 = vector.extract_strided_slice %198 {offsets = [0, 64], sizes = [16, 16], strides = [1, 1]} : vector<16x96xf32> to vector<16x16xf32>
    %cst_95 = arith.constant dense<0.000000e+00> : vector<16x16xf32>
    %202 = tpu.matmul %199, %200, %cst_95 {dimension_numbers = #tpu.dot_dimension_numbers<[1], [1], [0], [0], [0, 0, 1, 0], [], []>} : vector<16x16xf32>, vector<16x16xf32>, vector<16x16xf32> -> vector<16x16xf32>
    %203 = arith.addf %202, %60 : vector<16x16xf32>
    %cst_96 = arith.constant dense<0xFF800000> : vector<16xf32>
    %204 = vector.multi_reduction <maximumf>, %203, %cst_96 [1] : vector<16x16xf32> to vector<16xf32>
    %205 = vector.shape_cast %204 : vector<16xf32> to vector<16x1xf32>
    %206 = vector.broadcast %205 : vector<16x1xf32> to vector<16x16xf32>
    %207 = arith.subf %203, %206 : vector<16x16xf32>
    %208 = math.exp %207 : vector<16x16xf32>
    %cst_97 = arith.constant dense<0.000000e+00> : vector<16xf32>
    %209 = vector.multi_reduction <add>, %208, %cst_97 [1] : vector<16x16xf32> to vector<16xf32>
    %210 = vector.shape_cast %209 : vector<16xf32> to vector<16x1xf32>
    %211 = tpu.reciprocal %210 {approx = true} : vector<16x1xf32> -> vector<16x1xf32>
    %212 = vector.broadcast %211 : vector<16x1xf32> to vector<16x16xf32>
    %213 = arith.mulf %208, %212 : vector<16x16xf32>
    %cst_98 = arith.constant dense<0.000000e+00> : vector<16x16xf32>
    %214 = tpu.matmul %213, %201, %cst_98 {dimension_numbers = #tpu.dot_dimension_numbers<[1], [0], [0], [1], [0, 0, 1, 1], [], []>} : vector<16x16xf32>, vector<16x16xf32>, vector<16x16xf32> -> vector<16x16xf32>
    %c2 = arith.constant 2 : index
    %c0_99 = arith.constant 0 : index
    %c0_100 = arith.constant 0 : index
    %215 = vector.load %arg9[%c2, %c0_99, %c0_100] : memref<4x16x32xf32, #tpu.memory_space<vmem>>, vector<1x16x32xf32>
    %216 = vector.shape_cast %215 : vector<1x16x32xf32> to vector<16x32xf32>
    %cst_101 = arith.constant dense<0.000000e+00> : vector<16x32xf32>
    %217 = tpu.matmul %214, %216, %cst_101 {dimension_numbers = #tpu.dot_dimension_numbers<[1], [0], [0], [1], [0, 0, 1, 1], [], []>} : vector<16x16xf32>, vector<16x32xf32>, vector<16x32xf32> -> vector<16x32xf32>
    %218 = vector.extract_strided_slice %198 {offsets = [0, 16], sizes = [16, 16], strides = [1, 1]} : vector<16x96xf32> to vector<16x16xf32>
    %219 = vector.extract_strided_slice %198 {offsets = [0, 48], sizes = [16, 16], strides = [1, 1]} : vector<16x96xf32> to vector<16x16xf32>
    %220 = vector.extract_strided_slice %198 {offsets = [0, 80], sizes = [16, 16], strides = [1, 1]} : vector<16x96xf32> to vector<16x16xf32>
    %cst_102 = arith.constant dense<0.000000e+00> : vector<16x16xf32>
    %221 = tpu.matmul %218, %219, %cst_102 {dimension_numbers = #tpu.dot_dimension_numbers<[1], [1], [0], [0], [0, 0, 1, 0], [], []>} : vector<16x16xf32>, vector<16x16xf32>, vector<16x16xf32> -> vector<16x16xf32>
    %222 = arith.addf %221, %60 : vector<16x16xf32>
    %cst_103 = arith.constant dense<0xFF800000> : vector<16xf32>
    %223 = vector.multi_reduction <maximumf>, %222, %cst_103 [1] : vector<16x16xf32> to vector<16xf32>
    %224 = vector.shape_cast %223 : vector<16xf32> to vector<16x1xf32>
    %225 = vector.broadcast %224 : vector<16x1xf32> to vector<16x16xf32>
    %226 = arith.subf %222, %225 : vector<16x16xf32>
    %227 = math.exp %226 : vector<16x16xf32>
    %cst_104 = arith.constant dense<0.000000e+00> : vector<16xf32>
    %228 = vector.multi_reduction <add>, %227, %cst_104 [1] : vector<16x16xf32> to vector<16xf32>
    %229 = vector.shape_cast %228 : vector<16xf32> to vector<16x1xf32>
    %230 = tpu.reciprocal %229 {approx = true} : vector<16x1xf32> -> vector<16x1xf32>
    %231 = vector.broadcast %230 : vector<16x1xf32> to vector<16x16xf32>
    %232 = arith.mulf %227, %231 : vector<16x16xf32>
    %cst_105 = arith.constant dense<0.000000e+00> : vector<16x16xf32>
    %233 = tpu.matmul %232, %220, %cst_105 {dimension_numbers = #tpu.dot_dimension_numbers<[1], [0], [0], [1], [0, 0, 1, 1], [], []>} : vector<16x16xf32>, vector<16x16xf32>, vector<16x16xf32> -> vector<16x16xf32>
    %c3 = arith.constant 3 : index
    %c0_106 = arith.constant 0 : index
    %c0_107 = arith.constant 0 : index
    %234 = vector.load %arg9[%c3, %c0_106, %c0_107] : memref<4x16x32xf32, #tpu.memory_space<vmem>>, vector<1x16x32xf32>
    %235 = vector.shape_cast %234 : vector<1x16x32xf32> to vector<16x32xf32>
    %cst_108 = arith.constant dense<0.000000e+00> : vector<16x32xf32>
    %236 = tpu.matmul %233, %235, %cst_108 {dimension_numbers = #tpu.dot_dimension_numbers<[1], [0], [0], [1], [0, 0, 1, 1], [], []>} : vector<16x16xf32>, vector<16x32xf32>, vector<16x32xf32> -> vector<16x32xf32>
    %237 = arith.addf %217, %236 : vector<16x32xf32>
    %c1_109 = arith.constant 1 : index
    %c0_110 = arith.constant 0 : index
    %c0_111 = arith.constant 0 : index
    %238 = vector.load %arg10[%c1_109, %c0_110, %c0_111] : memref<2x1x32xf32, #tpu.memory_space<vmem>>, vector<1x1x32xf32>
    %239 = vector.shape_cast %238 : vector<1x1x32xf32> to vector<1x32xf32>
    %240 = vector.broadcast %239 : vector<1x32xf32> to vector<16x32xf32>
    %241 = arith.addf %237, %240 : vector<16x32xf32>
    %242 = arith.addf %191, %241 : vector<16x32xf32>
    %243 = vector.shape_cast %242 : vector<16x32xf32> to vector<2x8x32xf32>
    %244 = vector.extract_strided_slice %243 {offsets = [0, 0, 0], sizes = [2, 1, 32], strides = [1, 1, 1]} : vector<2x8x32xf32> to vector<2x1x32xf32>
    %245 = vector.shape_cast %244 : vector<2x1x32xf32> to vector<2x32xf32>
    %c1_112 = arith.constant 1 : index
    %c0_113 = arith.constant 0 : index
    %c0_114 = arith.constant 0 : index
    %246 = vector.load %arg11[%c1_112, %c0_113, %c0_114] : memref<2x1x32xf32, #tpu.memory_space<vmem>>, vector<1x1x32xf32>
    %247 = vector.shape_cast %246 : vector<1x1x32xf32> to vector<1x32xf32>
    %c1_115 = arith.constant 1 : index
    %c0_116 = arith.constant 0 : index
    %c0_117 = arith.constant 0 : index
    %248 = vector.load %arg12[%c1_115, %c0_116, %c0_117] : memref<2x1x32xf32, #tpu.memory_space<vmem>>, vector<1x1x32xf32>
    %249 = vector.shape_cast %248 : vector<1x1x32xf32> to vector<1x32xf32>
    %cst_118 = arith.constant dense<0.000000e+00> : vector<2xf32>
    %250 = vector.multi_reduction <add>, %245, %cst_118 [1] : vector<2x32xf32> to vector<2xf32>
    %251 = vector.shape_cast %250 : vector<2xf32> to vector<2x1xf32>
    %cst_119 = arith.constant 3.200000e+01 : f32
    %252 = vector.broadcast %cst_119 : f32 to vector<2x1xf32>
    %253 = arith.divf %251, %252 : vector<2x1xf32>
    %254 = arith.mulf %245, %245 : vector<2x32xf32>
    %cst_120 = arith.constant dense<0.000000e+00> : vector<2xf32>
    %255 = vector.multi_reduction <add>, %254, %cst_120 [1] : vector<2x32xf32> to vector<2xf32>
    %256 = vector.shape_cast %255 : vector<2xf32> to vector<2x1xf32>
    %cst_121 = arith.constant 3.200000e+01 : f32
    %257 = vector.broadcast %cst_121 : f32 to vector<2x1xf32>
    %258 = arith.divf %256, %257 : vector<2x1xf32>
    %259 = arith.mulf %253, %253 : vector<2x1xf32>
    %260 = arith.subf %258, %259 : vector<2x1xf32>
    %261 = vector.broadcast %253 : vector<2x1xf32> to vector<2x32xf32>
    %262 = arith.subf %245, %261 : vector<2x32xf32>
    %cst_122 = arith.constant 9.99999996E-13 : f32
    %263 = vector.broadcast %cst_122 : f32 to vector<2x1xf32>
    %264 = arith.addf %260, %263 : vector<2x1xf32>
    %265 = math.rsqrt %264 : vector<2x1xf32>
    %266 = vector.broadcast %265 : vector<2x1xf32> to vector<2x32xf32>
    %267 = arith.mulf %262, %266 : vector<2x32xf32>
    %268 = vector.broadcast %247 : vector<1x32xf32> to vector<2x32xf32>
    %269 = arith.mulf %267, %268 : vector<2x32xf32>
    %270 = vector.broadcast %249 : vector<1x32xf32> to vector<2x32xf32>
    %271 = arith.addf %269, %270 : vector<2x32xf32>
    %c1_123 = arith.constant 1 : index
    %c0_124 = arith.constant 0 : index
    %c0_125 = arith.constant 0 : index
    %272 = vector.load %arg13[%c1_123, %c0_124, %c0_125] : memref<2x32x64xf32, #tpu.memory_space<vmem>>, vector<1x32x64xf32>
    %273 = vector.shape_cast %272 : vector<1x32x64xf32> to vector<32x64xf32>
    %cst_126 = arith.constant dense<0.000000e+00> : vector<2x64xf32>
    %274 = tpu.matmul %271, %273, %cst_126 {dimension_numbers = #tpu.dot_dimension_numbers<[1], [0], [0], [1], [0, 0, 1, 1], [], []>} : vector<2x32xf32>, vector<32x64xf32>, vector<2x64xf32> -> vector<2x64xf32>
    %c1_127 = arith.constant 1 : index
    %c0_128 = arith.constant 0 : index
    %c0_129 = arith.constant 0 : index
    %275 = vector.load %arg14[%c1_127, %c0_128, %c0_129] : memref<2x1x64xf32, #tpu.memory_space<vmem>>, vector<1x1x64xf32>
    %276 = vector.shape_cast %275 : vector<1x1x64xf32> to vector<1x64xf32>
    %277 = vector.broadcast %276 : vector<1x64xf32> to vector<2x64xf32>
    %278 = arith.addf %274, %277 : vector<2x64xf32>
    %cst_130 = arith.constant 5.000000e-01 : f32
    %279 = vector.broadcast %cst_130 : f32 to vector<2x64xf32>
    %280 = arith.mulf %279, %278 : vector<2x64xf32>
    %cst_131 = arith.constant 4.471500e-02 : f32
    %281 = vector.broadcast %cst_131 : f32 to vector<2x64xf32>
    %282 = arith.mulf %281, %278 : vector<2x64xf32>
    %283 = arith.mulf %282, %278 : vector<2x64xf32>
    %284 = arith.mulf %283, %278 : vector<2x64xf32>
    %285 = arith.addf %278, %284 : vector<2x64xf32>
    %cst_132 = arith.constant 0.797884583 : f32
    %286 = vector.broadcast %cst_132 : f32 to vector<2x64xf32>
    %287 = arith.mulf %286, %285 : vector<2x64xf32>
    %288 = math.tanh %287 : vector<2x64xf32>
    %cst_133 = arith.constant 1.000000e+00 : f32
    %289 = vector.broadcast %cst_133 : f32 to vector<2x64xf32>
    %290 = arith.addf %289, %288 : vector<2x64xf32>
    %291 = arith.mulf %280, %290 : vector<2x64xf32>
    %c1_134 = arith.constant 1 : index
    %c0_135 = arith.constant 0 : index
    %c0_136 = arith.constant 0 : index
    %292 = vector.load %arg15[%c1_134, %c0_135, %c0_136] : memref<2x64x32xf32, #tpu.memory_space<vmem>>, vector<1x64x32xf32>
    %293 = vector.shape_cast %292 : vector<1x64x32xf32> to vector<64x32xf32>
    %cst_137 = arith.constant dense<0.000000e+00> : vector<2x32xf32>
    %294 = tpu.matmul %291, %293, %cst_137 {dimension_numbers = #tpu.dot_dimension_numbers<[1], [0], [0], [1], [0, 0, 1, 1], [], []>} : vector<2x64xf32>, vector<64x32xf32>, vector<2x32xf32> -> vector<2x32xf32>
    %c1_138 = arith.constant 1 : index
    %c0_139 = arith.constant 0 : index
    %c0_140 = arith.constant 0 : index
    %295 = vector.load %arg16[%c1_138, %c0_139, %c0_140] : memref<2x1x32xf32, #tpu.memory_space<vmem>>, vector<1x1x32xf32>
    %296 = vector.shape_cast %295 : vector<1x1x32xf32> to vector<1x32xf32>
    %297 = vector.broadcast %296 : vector<1x32xf32> to vector<2x32xf32>
    %298 = arith.addf %294, %297 : vector<2x32xf32>
    %299 = arith.addf %271, %298 : vector<2x32xf32>
    %c1_141 = arith.constant 1 : index
    %c0_142 = arith.constant 0 : index
    %c0_143 = arith.constant 0 : index
    %300 = vector.load %arg17[%c1_141, %c0_142, %c0_143] : memref<2x1x32xf32, #tpu.memory_space<vmem>>, vector<1x1x32xf32>
    %301 = vector.shape_cast %300 : vector<1x1x32xf32> to vector<1x32xf32>
    %c1_144 = arith.constant 1 : index
    %c0_145 = arith.constant 0 : index
    %c0_146 = arith.constant 0 : index
    %302 = vector.load %arg18[%c1_144, %c0_145, %c0_146] : memref<2x1x32xf32, #tpu.memory_space<vmem>>, vector<1x1x32xf32>
    %303 = vector.shape_cast %302 : vector<1x1x32xf32> to vector<1x32xf32>
    %cst_147 = arith.constant dense<0.000000e+00> : vector<2xf32>
    %304 = vector.multi_reduction <add>, %299, %cst_147 [1] : vector<2x32xf32> to vector<2xf32>
    %305 = vector.shape_cast %304 : vector<2xf32> to vector<2x1xf32>
    %cst_148 = arith.constant 3.200000e+01 : f32
    %306 = vector.broadcast %cst_148 : f32 to vector<2x1xf32>
    %307 = arith.divf %305, %306 : vector<2x1xf32>
    %308 = arith.mulf %299, %299 : vector<2x32xf32>
    %cst_149 = arith.constant dense<0.000000e+00> : vector<2xf32>
    %309 = vector.multi_reduction <add>, %308, %cst_149 [1] : vector<2x32xf32> to vector<2xf32>
    %310 = vector.shape_cast %309 : vector<2xf32> to vector<2x1xf32>
    %cst_150 = arith.constant 3.200000e+01 : f32
    %311 = vector.broadcast %cst_150 : f32 to vector<2x1xf32>
    %312 = arith.divf %310, %311 : vector<2x1xf32>
    %313 = arith.mulf %307, %307 : vector<2x1xf32>
    %314 = arith.subf %312, %313 : vector<2x1xf32>
    %315 = vector.broadcast %307 : vector<2x1xf32> to vector<2x32xf32>
    %316 = arith.subf %299, %315 : vector<2x32xf32>
    %cst_151 = arith.constant 9.99999996E-13 : f32
    %317 = vector.broadcast %cst_151 : f32 to vector<2x1xf32>
    %318 = arith.addf %314, %317 : vector<2x1xf32>
    %319 = math.rsqrt %318 : vector<2x1xf32>
    %320 = vector.broadcast %319 : vector<2x1xf32> to vector<2x32xf32>
    %321 = arith.mulf %316, %320 : vector<2x32xf32>
    %322 = vector.broadcast %301 : vector<1x32xf32> to vector<2x32xf32>
    %323 = arith.mulf %321, %322 : vector<2x32xf32>
    %324 = vector.broadcast %303 : vector<1x32xf32> to vector<2x32xf32>
    %325 = arith.addf %323, %324 : vector<2x32xf32>
    %c0_152 = arith.constant 0 : index
    %c0_153 = arith.constant 0 : index
    %326 = vector.load %arg19[%c0_152, %c0_153] : memref<32x3xf32, #tpu.memory_space<vmem>>, vector<32x3xf32>
    %cst_154 = arith.constant dense<0.000000e+00> : vector<2x3xf32>
    %327 = tpu.matmul %325, %326, %cst_154 {dimension_numbers = #tpu.dot_dimension_numbers<[1], [0], [0], [1], [0, 0, 1, 1], [], []>} : vector<2x32xf32>, vector<32x3xf32>, vector<2x3xf32> -> vector<2x3xf32>
    %c0_155 = arith.constant 0 : index
    %c0_156 = arith.constant 0 : index
    %328 = vector.load %arg20[%c0_155, %c0_156] : memref<1x3xf32, #tpu.memory_space<vmem>>, vector<1x3xf32>
    %329 = vector.broadcast %328 : vector<1x3xf32> to vector<2x3xf32>
    %330 = arith.addf %327, %329 : vector<2x3xf32>
    %c0_157 = arith.constant 0 : index
    %c0_158 = arith.constant 0 : index
    %331 = vector.load %arg21[%c0_157, %c0_158] : memref<2x3xf32, #tpu.memory_space<vmem>>, vector<2x3xf32>
    tpu.vector_store %arg21[%c0_157, %c0_158], %330 {strides = array<i32>} : memref<2x3xf32, #tpu.memory_space<vmem>>, vector<2x3xf32>,
    return
  }
}

</mosaic_0001>

<llo_original>
// kernel: emotion_bert_forward.1
$region0: #{emotion_bert_forward.1}
  #allocation0 [shape = 'u32[]', space=smem, size = 0x4, offset = 0x4, fixed_abs, tag = 'smem constant byte address 0x4 - core index']
  #allocation1 [shape = 'u32[72,128]{1,0:T(1,128)}', space=vmem, size = 0x9000, scoped, tag = 'internal scratch']
  %s0 = inlined_call_operand.vmem [shape: s32[16,1], index: 0, kind: input, shape index: {}]
  %s1 = inlined_call_operand.vmem [shape: f32[1,16], index: 1, kind: input, shape index: {}]
  %s2 = inlined_call_operand.vmem [shape: f32[128,32], index: 2, kind: input, shape index: {}]
  %s3 = inlined_call_operand.vmem [shape: f32[64,32], index: 3, kind: input, shape index: {}]
  %s4 = inlined_call_operand.vmem [shape: f32[2,32], index: 4, kind: input, shape index: {}]
  %s5 = inlined_call_operand.vmem [shape: f32[1,32], index: 5, kind: input, shape index: {}]
  %s6 = inlined_call_operand.vmem [shape: f32[1,32], index: 6, kind: input, shape index: {}]
  %s7 = inlined_call_operand.vmem [shape: f32[2,32,96], index: 7, kind: input, shape index: {}]
  %s8 = inlined_call_operand.vmem [shape: f32[2,1,96], index: 8, kind: input, shape index: {}]
  %s9 = inlined_call_operand.vmem [shape: f32[4,16,32], index: 9, kind: input, shape index: {}]
  %s10 = inlined_call_operand.vmem [shape: f32[2,1,32], index: 10, kind: input, shape index: {}]
  %s11 = inlined_call_operand.vmem [shape: f32[2,1,32], index: 11, kind: input, shape index: {}]
  %s12 = inlined_call_operand.vmem [shape: f32[2,1,32], index: 12, kind: input, shape index: {}]
  %s13 = inlined_call_operand.vmem [shape: f32[2,32,64], index: 13, kind: input, shape index: {}]
  %s14 = inlined_call_operand.vmem [shape: f32[2,1,64], index: 14, kind: input, shape index: {}]
  %s15 = inlined_call_operand.vmem [shape: f32[2,64,32], index: 15, kind: input, shape index: {}]
  %s16 = inlined_call_operand.vmem [shape: f32[2,1,32], index: 16, kind: input, shape index: {}]
  %s17 = inlined_call_operand.vmem [shape: f32[2,1,32], index: 17, kind: input, shape index: {}]
  %s18 = inlined_call_operand.vmem [shape: f32[2,1,32], index: 18, kind: input, shape index: {}]
  %s19 = inlined_call_operand.vmem [shape: f32[32,3], index: 19, kind: input, shape index: {}]
  %s20 = inlined_call_operand.vmem [shape: f32[1,3], index: 20, kind: input, shape index: {}]
  %s21 = inlined_call_operand.hbm [shape: f32[2,3], index: 21, kind: output, shape index: {}]
  %s22 = sld [smem:[#allocation0]]
  $region94: #{emotion_bert_forward.1} parent=0
    _
  %s24 = ssub.s32 1, %s22
  %s25 = scalar_select 0, %s24, %s22
  $region1: #{emotion_bert_forward.1} parent=0
    #allocation2 [shape = 'u8[1024]{0}', space=vmem, size = 0x400, scoped, tag = 'output window, operand 0, single buffered']
    #allocation3 [shape = 's32[1]{0}', space=sflag, size = 0x4, scoped, tag = 'scoped memory for emotion_bert_forward.1']
    %26 = vsyncpa [#allocation3], 0
    // Predicated region
    $region2: #{emotion_bert_forward.1} parent=1 // pred_check
      _
    $region3: #{emotion_bert_forward.1} parent=1 // pred_check_branch
      %28 = sbr.rel (0) target = $region5
    $region4: #{emotion_bert_forward.1} parent=1 // pred_region
      _
    $region5: #{emotion_bert_forward.1} parent=1 // pred_fallthru
      _
    // Predicated region
    $region6: #{emotion_bert_forward.1} parent=1 // pred_check
      _
    $region7: #{emotion_bert_forward.1} parent=1 // pred_check_branch
      %30 = sbr.rel (0) target = $region9
    $region8: #{emotion_bert_forward.1} parent=1 // pred_region
      _
    $region9: #{emotion_bert_forward.1} parent=1 // pred_fallthru
      _
    // Predicated region
    $region10: #{emotion_bert_forward.1} parent=1 // pred_check
      _
    $region11: #{emotion_bert_forward.1} parent=1 // pred_check_branch
      %32 = sbr.rel (0) target = $region13
    $region12: #{emotion_bert_forward.1} parent=1 // pred_region
      _
    $region13: #{emotion_bert_forward.1} parent=1 // pred_fallthru
      _
    // Predicated region
    $region14: #{emotion_bert_forward.1} parent=1 // pred_check
      _
    $region15: #{emotion_bert_forward.1} parent=1 // pred_check_branch
      %34 = sbr.rel (0) target = $region17
    $region16: #{emotion_bert_forward.1} parent=1 // pred_region
      _
    $region17: #{emotion_bert_forward.1} parent=1 // pred_fallthru
      _
    // Predicated region
    $region18: #{emotion_bert_forward.1} parent=1 // pred_check
      _
    $region19: #{emotion_bert_forward.1} parent=1 // pred_check_branch
      %36 = sbr.rel (0) target = $region21
    $region20: #{emotion_bert_forward.1} parent=1 // pred_region
      _
    $region21: #{emotion_bert_forward.1} parent=1 // pred_fallthru
      _
    // Predicated region
    $region22: #{emotion_bert_forward.1} parent=1 // pred_check
      _
    $region23: #{emotion_bert_forward.1} parent=1 // pred_check_branch
      %38 = sbr.rel (0) target = $region25
    $region24: #{emotion_bert_forward.1} parent=1 // pred_region
      _
    $region25: #{emotion_bert_forward.1} parent=1 // pred_fallthru
      _
    // Predicated region
    $region26: #{emotion_bert_forward.1} parent=1 // pred_check
      _
    $region27: #{emotion_bert_forward.1} parent=1 // pred_check_branch
      %40 = sbr.rel (0) target = $region29
    $region28: #{emotion_bert_forward.1} parent=1 // pred_region
      _
    $region29: #{emotion_bert_forward.1} parent=1 // pred_fallthru
      _
    // Predicated region
    $region30: #{emotion_bert_forward.1} parent=1 // pred_check
      _
    $region31: #{emotion_bert_forward.1} parent=1 // pred_check_branch
      %42 = sbr.rel (0) target = $region33
    $region32: #{emotion_bert_forward.1} parent=1 // pred_region
      _
    $region33: #{emotion_bert_forward.1} parent=1 // pred_fallthru
      _
    // Predicated region
    $region34: #{emotion_bert_forward.1} parent=1 // pred_check
      _
    $region35: #{emotion_bert_forward.1} parent=1 // pred_check_branch
      %44 = sbr.rel (0) target = $region37
    $region36: #{emotion_bert_forward.1} parent=1 // pred_region
      _
    $region37: #{emotion_bert_forward.1} parent=1 // pred_fallthru
      _
    // Predicated region
    $region38: #{emotion_bert_forward.1} parent=1 // pred_check
      _
    $region39: #{emotion_bert_forward.1} parent=1 // pred_check_branch
      %46 = sbr.rel (0) target = $region41
    $region40: #{emotion_bert_forward.1} parent=1 // pred_region
      _
    $region41: #{emotion_bert_forward.1} parent=1 // pred_fallthru
      _
    // Predicated region
    $region42: #{emotion_bert_forward.1} parent=1 // pred_check
      _
    $region43: #{emotion_bert_forward.1} parent=1 // pred_check_branch
      %48 = sbr.rel (0) target = $region45
    $region44: #{emotion_bert_forward.1} parent=1 // pred_region
      _
    $region45: #{emotion_bert_forward.1} parent=1 // pred_fallthru
      _
    // Predicated region
    $region46: #{emotion_bert_forward.1} parent=1 // pred_check
      _
    $region47: #{emotion_bert_forward.1} parent=1 // pred_check_branch
      %50 = sbr.rel (0) target = $region49
    $region48: #{emotion_bert_forward.1} parent=1 // pred_region
      _
    $region49: #{emotion_bert_forward.1} parent=1 // pred_fallthru
      _
    // Predicated region
    $region50: #{emotion_bert_forward.1} parent=1 // pred_check
      _
    $region51: #{emotion_bert_forward.1} parent=1 // pred_check_branch
      %52 = sbr.rel (0) target = $region53
    $region52: #{emotion_bert_forward.1} parent=1 // pred_region
      _
    $region53: #{emotion_bert_forward.1} parent=1 // pred_fallthru
      _
    // Predicated region
    $region54: #{emotion_bert_forward.1} parent=1 // pred_check
      _
    $region55: #{emotion_bert_forward.1} parent=1 // pred_check_branch
      %54 = sbr.rel (0) target = $region57
    $region56: #{emotion_bert_forward.1} parent=1 // pred_region
      _
    $region57: #{emotion_bert_forward.1} parent=1 // pred_fallthru
      _
    // Predicated region
    $region58: #{emotion_bert_forward.1} parent=1 // pred_check
      _
    $region59: #{emotion_bert_forward.1} parent=1 // pred_check_branch
      %56 = sbr.rel (0) target = $region61
    $region60: #{emotion_bert_forward.1} parent=1 // pred_region
      _
    $region61: #{emotion_bert_forward.1} parent=1 // pred_fallthru
      _
    // Predicated region
    $region62: #{emotion_bert_forward.1} parent=1 // pred_check
      _
    $region63: #{emotion_bert_forward.1} parent=1 // pred_check_branch
      %58 = sbr.rel (0) target = $region65
    $region64: #{emotion_bert_forward.1} parent=1 // pred_region
      _
    $region65: #{emotion_bert_forward.1} parent=1 // pred_fallthru
      _
    // Predicated region
    $region66: #{emotion_bert_forward.1} parent=1 // pred_check
      _
    $region67: #{emotion_bert_forward.1} parent=1 // pred_check_branch
      %60 = sbr.rel (0) target = $region69
    $region68: #{emotion_bert_forward.1} parent=1 // pred_region
      _
    $region69: #{emotion_bert_forward.1} parent=1 // pred_fallthru
      _
    // Predicated region
    $region70: #{emotion_bert_forward.1} parent=1 // pred_check
      _
    $region71: #{emotion_bert_forward.1} parent=1 // pred_check_branch
      %62 = sbr.rel (0) target = $region73
    $region72: #{emotion_bert_forward.1} parent=1 // pred_region
      _
    $region73: #{emotion_bert_forward.1} parent=1 // pred_fallthru
      _
    // Predicated region
    $region74: #{emotion_bert_forward.1} parent=1 // pred_check
      _
    $region75: #{emotion_bert_forward.1} parent=1 // pred_check_branch
      %64 = sbr.rel (0) target = $region77
    $region76: #{emotion_bert_forward.1} parent=1 // pred_region
      _
    $region77: #{emotion_bert_forward.1} parent=1 // pred_fallthru
      _
    // Predicated region
    $region78: #{emotion_bert_forward.1} parent=1 // pred_check
      _
    $region79: #{emotion_bert_forward.1} parent=1 // pred_check_branch
      %66 = sbr.rel (0) target = $region81
    $region80: #{emotion_bert_forward.1} parent=1 // pred_region
      _
    $region81: #{emotion_bert_forward.1} parent=1 // pred_fallthru
      _
    // Predicated region
    $region82: #{emotion_bert_forward.1} parent=1 // pred_check
      _
    $region83: #{emotion_bert_forward.1} parent=1 // pred_check_branch
      %68 = sbr.rel (0) target = $region85
    $region84: #{emotion_bert_forward.1} parent=1 // pred_region
      _
    $region85: #{emotion_bert_forward.1} parent=1 // pred_fallthru
      _
    %v69 = vld [vmem:[%s0] sm:$0xff]
    %v70 = vld [vmem:[%s0 + $0x8] sm:$0xff]
    %v71 = vlaneseq
    %v72 = vand.u32 %v71, 127
    %73 = vset.pattern.permute.xlu0 0
    %74 = vperm.xlu0 %73, %v69
    %v75 = vpop.permute.xlu0 %74
    %76 = vset.pattern.permute.xlu0 0
    %77 = vperm.xlu0 %76, %v70
    %v78 = vpop.permute.xlu0 %77
    %vm79 = vcmp.eq.s32.totalorder %v72, %v75
    %vm80 = vcmp.eq.s32.totalorder %v72, %v78
    %v81 = vsel %vm79, 1, 0
    %v82 = vsel %vm80, 1, 0
    %v83 = vcvt.s32.f32 %v81
    %v84 = vcvt.s32.f32 %v82
    %v85 = vld [vmem:[%s2] sm:$0xff]
    %v86 = vld [vmem:[%s2 + $0x8] sm:$0xff]
    %v87 = vld [vmem:[%s2 + $0x10] sm:$0xff]
    %v88 = vld [vmem:[%s2 + $0x18] sm:$0xff]
    %v89 = vld [vmem:[%s2 + $0x20] sm:$0xff]
    %v90 = vld [vmem:[%s2 + $0x28] sm:$0xff]
    %v91 = vld [vmem:[%s2 + $0x30] sm:$0xff]
    %v92 = vld [vmem:[%s2 + $0x38] sm:$0xff]
    %v93 = vld [vmem:[%s2 + $0x40] sm:$0xff]
    %v94 = vld [vmem:[%s2 + $0x48] sm:$0xff]
    %v95 = vld [vmem:[%s2 + $0x50] sm:$0xff]
    %v96 = vld [vmem:[%s2 + $0x58] sm:$0xff]
    %v97 = vld [vmem:[%s2 + $0x60] sm:$0xff]
    %v98 = vld [vmem:[%s2 + $0x68] sm:$0xff]
    %v99 = vld [vmem:[%s2 + $0x70] sm:$0xff]
    %v100 = vld [vmem:[%s2 + $0x78] sm:$0xff]
    %101 = vmatpush.msra.mxu0 %v100
    %102 = vmatpush.msra.mxu0 %v99
    %103 = vmatpush.msra.mxu0 %v98
    %104 = vmatpush.msra.mxu0 %v97
    %105 = vmatpush.msra.mxu0 %v96
    %106 = vmatpush.msra.mxu0 %v95
    %107 = vmatpush.msra.mxu0 %v94
    %108 = vmatpush.msra.mxu0 %v93
    %109 = vmatpush.msra.mxu0 %v92
    %110 = vmatpush.msra.mxu0 %v91
    %111 = vmatpush.msra.mxu0 %v90
    %112 = vmatpush.msra.mxu0 %v89
    %113 = vmatpush.msra.mxu0 %v88
    %114 = vmatpush.msra.mxu0 %v87
    %115 = vmatpush.msra.mxu0 %v86
    %116 = vmatpush.msra.mxu0 %v85
    %117 = vmatmul.f32.gmra.mxu0 %v83
    %v118 = vpop.f32.mrf.mxu0
    %v119 = vadd.f32 0.0, %v118
    %120 = vmatmul.f32.gmra.mxu0 %v84
    %v121 = vpop.f32.mrf.mxu0
    %v122 = vadd.f32 0.0, %v121
    %123 = vdwg.mxu0
    %v124 = vld [vmem:[%s3] sm:$0xff]
    %v125 = vadd.f32 %v119, %v124
    %v126 = vadd.f32 %v122, %v124
    %v127 = vld [vmem:[%s4] sm:$0x1]
    %v128 = vperm.slane %v127, 0
    %v129 = vadd.f32 %v125, %v128
    %v130 = vadd.f32 %v126, %v128
    %v131 = vld [vmem:[%s5] sm:$0x1]
    %v132 = vld [vmem:[%s6] sm:$0x1]
    %vm133 = vcmask 261120
    %v134 = vsel %vm133, %v129, 0.0
    %135 = vadd.xlane.f32.xlu0 %v134
    %v136 = vpop.xlane.xlu0 %135
    %v137 = vsel %vm133, %v130, 0.0
    %138 = vadd.xlane.f32.xlu0 %v137
    %v139 = vpop.xlane.xlu0 %138
    %v140 = vrcp.pop 32.0
    %v141 = vmul.f32 32.0, %v140
    %v142 = vsub.f32 1.0, %v141
    %v143 = vmul.f32 %v140, %v142
    %v144 = vadd.f32 %v140, %v143
    %vm145 = vweird.f32 %v140
    %v146 = vsel %vm145, %v140, %v144
    %v147 = vmul.f32 %v136, %v146
    %v148 = vmul.f32 %v139, %v146
    %v149 = vmul.f32 %v129, %v129
    %v150 = vmul.f32 %v130, %v130
    %v151 = vsel %vm133, %v149, 0.0
    %152 = vadd.xlane.f32.xlu0 %v151
    %v153 = vpop.xlane.xlu0 %152
    %v154 = vsel %vm133, %v150, 0.0
    %155 = vadd.xlane.f32.xlu0 %v154
    %v156 = vpop.xlane.xlu0 %155
    %v157 = vmul.f32 %v153, %v146
    %v158 = vmul.f32 %v156, %v146
    %v159 = vmul.f32 %v147, %v147
    %v160 = vmul.f32 %v148, %v148
    %v161 = vsub.f32 %v157, %v159
    %v162 = vsub.f32 %v158, %v160
    %v163 = vsub.f32 %v129, %v147
    %v164 = vsub.f32 %v130, %v148
    %v165 = vadd.f32 %v161, 1e-12
    %v166 = vadd.f32 %v162, 1e-12
    %v167 = vrsqrt.pop %v165
    %v168 = vmul.f32 %v167, %v165
    %v169 = vmul.f32 %v168, %v167
    %v170 = vmul.f32 0.5, %v169
    %v171 = vsub.f32 1.5, %v170
    %v172 = vmul.f32 %v167, %v171
    %vm173 = vweird.f32 %v165
    %vm174 = vweird.f32 %v167
    %vm175 = vmor %vm173, %vm174
    %v176 = vsel %vm175, %v167, %v172
    %v177 = vrsqrt.pop %v166
    %v178 = vmul.f32 %v177, %v166
    %v179 = vmul.f32 %v178, %v177
    %v180 = vmul.f32 0.5, %v179
    %v181 = vsub.f32 1.5, %v180
    %v182 = vmul.f32 %v177, %v181
    %vm183 = vweird.f32 %v166
    %vm184 = vweird.f32 %v177
    %vm185 = vmor %vm183, %vm184
    %v186 = vsel %vm185, %v177, %v182
    %v187 = vmul.f32 %v163, %v176
    %v188 = vmul.f32 %v164, %v186
    %v190 = vperm.slane %v131, 0
    %v192 = vmul.f32 %v187, %v190
    %v193 = vmul.f32 %v188, %v190
    %v195 = vperm.slane %v132, 0
    %v197 = vadd.f32 %v192, %v195
    %v198 = vadd.f32 %v193, %v195
    %v199 = vlaneseq
    %v200 = vshrl.u32 %v199, 7
    %v201 = vadd.s32 %v200, 8
    %v202 = vcvt.s32.f32 %v200
    %v203 = vcvt.s32.f32 %v201
    %v204 = vcvt.s32.f32 %v72
    %v205 = vmul.f32 %v202, 0.125
    %v206 = vmul.f32 %v203, 0.125
    %v207 = vfloor.f32 %v205
    %v208 = vfloor.f32 %v206
    %v209 = vmul.f32 %v204, 0.125
    %v210 = vfloor.f32 %v209
    %vm211 = vcmp.eq.f32.partialorder %v207, %v210
    %vm212 = vcmp.eq.f32.partialorder %v208, %v210
    %v213 = vld [vmem:[%s1] sm:$0x1]
    %vm214 = vcmp.gt.f32.partialorder %v213, 0.5
    %v215 = vsel %vm214, 1, 0
    %v216 = vperm.slane %v215, 0
    %vm217 = vcmp.eq.s32.totalorder %v216, 1
    %vm218 = vmand %vm211, %vm217
    %vm219 = vmand %vm212, %vm217
    %v220 = vsel %vm218, 0.0, -1e+09
    %v221 = vsel %vm219, 0.0, -1e+09
    %v222 = vld [vmem:[%s7] sm:$0xff]
    %v223 = vld [vmem:[%s7 + $0x8] sm:$0xff]
    %v224 = vld [vmem:[%s7 + $0x10] sm:$0xff]
    %v225 = vld [vmem:[%s7 + $0x18] sm:$0xff]
    %v226 = vld [vmem:[%s8] sm:$0x1]
    %v228 = vperm.slane %v226, 0
    %v231 = vsel %vm133, %v197, 0
    %v234 = vsel %vm133, %v198, 0
    %236 = vmatpush.msra.mxu0 0.0
    %237 = vmatpush.msra.mxu0 0.0
    %238 = vmatpush.msra.mxu0 0.0
    %239 = vmatpush.msra.mxu0 0.0
    %240 = vmatpush.msra.mxu0 0.0
    %241 = vmatpush.msra.mxu0 0.0
    %242 = vmatpush.msra.mxu0 0.0
    %243 = vmatpush.msra.mxu0 0.0
    %244 = vmatpush.msra.mxu0 0.0
    %245 = vmatpush.msra.mxu0 0.0
    %246 = vmatpush.msra.mxu0 0.0
    %247 = vmatpush.msra.mxu0 0.0
    %248 = vmatpush.msra.mxu0 %v225
    %249 = vmatpush.msra.mxu0 %v224
    %250 = vmatpush.msra.mxu0 %v223
    %251 = vmatpush.msra.mxu0 %v222
    %252 = vmatmul.f32.gmra.mxu0 %v231
    %v253 = vpop.f32.mrf.mxu0
    %v254 = vadd.f32 %v228, %v253
    %255 = vmatmul.f32.gmra.mxu0 %v234
    %v256 = vpop.f32.mrf.mxu0
    %v257 = vadd.f32 %v228, %v256
    %258 = vdwg.mxu0
    %261 = vrot.lane.b32.xlu0 %v254, 96
    %v262 = vpop.permute.xlu0 %261
    %263 = vrot.lane.b32.xlu0 %v257, 96
    %v264 = vpop.permute.xlu0 %263
    %vm265 = vcmask 130048
    %v266 = vsel %vm265, %v254, 0
    %v268 = vsel %vm265, %v257, 0
    %v270 = vsel %vm265, %v262, 0
    %v272 = vsel %vm265, %v264, 0
    %274 = vmatpush.xpose.msra.mxu0 0.0
    %275 = vmatpush.xpose.msra.mxu0 0.0
    %276 = vmatpush.xpose.msra.mxu0 0.0
    %277 = vmatpush.xpose.msra.mxu0 0.0
    %278 = vmatpush.xpose.msra.mxu0 0.0
    %279 = vmatpush.xpose.msra.mxu0 0.0
    %280 = vmatpush.xpose.msra.mxu0 0.0
    %281 = vmatpush.xpose.msra.mxu0 0.0
    %282 = vmatpush.xpose.msra.mxu0 0.0
    %283 = vmatpush.xpose.msra.mxu0 0.0
    %284 = vmatpush.xpose.msra.mxu0 0.0
    %285 = vmatpush.xpose.msra.mxu0 0.0
    %286 = vmatpush.xpose.msra.mxu0 0.0
    %287 = vmatpush.xpose.msra.mxu0 0.0
    %288 = vmatpush.xpose.msra.mxu0 %v272
    %289 = vmatpush.xpose.msra.mxu0 %v270
    %290 = vmatmul.f32.gmra.mxu0 %v266
    %v291 = vpop.f32.mrf.mxu0
    %v292 = vadd.f32 %v220, %v291
    %293 = vmatmul.f32.gmra.mxu0 %v268
    %v294 = vpop.f32.mrf.mxu0
    %v295 = vadd.f32 %v221, %v294
    %296 = vdwg.mxu0
    %v297 = vsel %vm265, %v292, -inf
    %298 = vmax.xlane.f32.xlu0 %v297
    %v299 = vpop.xlane.xlu0 %298
    %v300 = vsel %vm265, %v295, -inf
    %301 = vmax.xlane.f32.xlu0 %v300
    %v302 = vpop.xlane.xlu0 %301
    %v303 = vsub.f32 %v292, %v299
    %v304 = vsub.f32 %v295, %v302
    %v305 = vmul.f32 %v303, 1.442695
    %v306 = vpow.pop %v305
    %v307 = vmul.f32 %v304, 1.442695
    %v308 = vpow.pop %v307
    %v309 = vsel %vm265, %v306, 0.0
    %310 = vadd.xlane.f32.xlu0 %v309
    %v311 = vpop.xlane.xlu0 %310
    %v312 = vsel %vm265, %v308, 0.0
    %313 = vadd.xlane.f32.xlu0 %v312
    %v314 = vpop.xlane.xlu0 %313
    %v315 = vrcp.pop %v311
    %v316 = vrcp.pop %v314
    %v317 = vmul.f32 %v306, %v315
    %v318 = vmul.f32 %v308, %v316
    %319 = vrot.lane.b32.xlu0 %v254, 64
    %v320 = vpop.permute.xlu0 %319
    %321 = vrot.lane.b32.xlu0 %v257, 64
    %v322 = vpop.permute.xlu0 %321
    %v326 = vsel %vm265, %v317, 0
    %v329 = vsel %vm265, %v318, 0
    %331 = vmatpush.msra.mxu0 0.0
    %332 = vmatpush.msra.mxu0 0.0
    %333 = vmatpush.msra.mxu0 0.0
    %334 = vmatpush.msra.mxu0 0.0
    %335 = vmatpush.msra.mxu0 0.0
    %336 = vmatpush.msra.mxu0 0.0
    %337 = vmatpush.msra.mxu0 0.0
    %338 = vmatpush.msra.mxu0 0.0
    %339 = vmatpush.msra.mxu0 0.0
    %340 = vmatpush.msra.mxu0 0.0
    %341 = vmatpush.msra.mxu0 0.0
    %342 = vmatpush.msra.mxu0 0.0
    %343 = vmatpush.msra.mxu0 0.0
    %344 = vmatpush.msra.mxu0 0.0
    %345 = vmatpush.msra.mxu0 %v322
    %346 = vmatpush.msra.mxu0 %v320
    %347 = vmatmul.f32.gmra.mxu0 %v326
    %v348 = vpop.f32.mrf.mxu0
    %v349 = vadd.f32 0.0, %v348
    %350 = vmatmul.f32.gmra.mxu0 %v329
    %v351 = vpop.f32.mrf.mxu0
    %v352 = vadd.f32 0.0, %v351
    %353 = vdwg.mxu0
    %v354 = vld [vmem:[%s9] sm:$0xff]
    %v355 = vld [vmem:[%s9 + $0x8] sm:$0xff]
    %356 = vrot.lane.b32.xlu0 %v254, 112
    %v357 = vpop.permute.xlu0 %356
    %358 = vrot.lane.b32.xlu0 %v257, 112
    %v359 = vpop.permute.xlu0 %358
    %360 = vrot.lane.b32.xlu0 %v254, 80
    %v361 = vpop.permute.xlu0 %360
    %362 = vrot.lane.b32.xlu0 %v257, 80
    %v363 = vpop.permute.xlu0 %362
    %v364 = vsel %vm265, %v357, 0
    %v366 = vsel %vm265, %v359, 0
    %v368 = vsel %vm265, %v361, 0
    %v370 = vsel %vm265, %v363, 0
    %372 = vmatpush.xpose.msra.mxu0 0.0
    %373 = vmatpush.xpose.msra.mxu0 0.0
    %374 = vmatpush.xpose.msra.mxu0 0.0
    %375 = vmatpush.xpose.msra.mxu0 0.0
    %376 = vmatpush.xpose.msra.mxu0 0.0
    %377 = vmatpush.xpose.msra.mxu0 0.0
    %378 = vmatpush.xpose.msra.mxu0 0.0
    %379 = vmatpush.xpose.msra.mxu0 0.0
    %380 = vmatpush.xpose.msra.mxu0 0.0
    %381 = vmatpush.xpose.msra.mxu0 0.0
    %382 = vmatpush.xpose.msra.mxu0 0.0
    %383 = vmatpush.xpose.msra.mxu0 0.0
    %384 = vmatpush.xpose.msra.mxu0 0.0
    %385 = vmatpush.xpose.msra.mxu0 0.0
    %386 = vmatpush.xpose.msra.mxu0 %v370
    %387 = vmatpush.xpose.msra.mxu0 %v368
    %388 = vmatmul.f32.gmra.mxu0 %v364
    %v389 = vpop.f32.mrf.mxu0
    %v390 = vadd.f32 %v220, %v389
    %391 = vmatmul.f32.gmra.mxu0 %v366
    %v392 = vpop.f32.mrf.mxu0
    %v393 = vadd.f32 %v221, %v392
    %394 = vdwg.mxu0
    %v395 = vsel %vm265, %v390, -inf
    %396 = vmax.xlane.f32.xlu0 %v395
    %v397 = vpop.xlane.xlu0 %396
    %v398 = vsel %vm265, %v393, -inf
    %399 = vmax.xlane.f32.xlu0 %v398
    %v400 = vpop.xlane.xlu0 %399
    %v401 = vsub.f32 %v390, %v397
    %v402 = vsub.f32 %v393, %v400
    %v403 = vmul.f32 %v401, 1.442695
    %v404 = vpow.pop %v403
    %v405 = vmul.f32 %v402, 1.442695
    %v406 = vpow.pop %v405
    %v407 = vsel %vm265, %v404, 0.0
    %408 = vadd.xlane.f32.xlu0 %v407
    %v409 = vpop.xlane.xlu0 %408
    %v410 = vsel %vm265, %v406, 0.0
    %411 = vadd.xlane.f32.xlu0 %v410
    %v412 = vpop.xlane.xlu0 %411
    %v413 = vrcp.pop %v409
    %v414 = vrcp.pop %v412
    %v415 = vmul.f32 %v404, %v413
    %v416 = vmul.f32 %v406, %v414
    %417 = vrot.lane.b32.xlu0 %v254, 48
    %v418 = vpop.permute.xlu0 %417
    %419 = vrot.lane.b32.xlu0 %v257, 48
    %v420 = vpop.permute.xlu0 %419
    %v424 = vsel %vm265, %v415, 0
    %v427 = vsel %vm265, %v416, 0
    %429 = vmatpush.msra.mxu0 0.0
    %430 = vmatpush.msra.mxu0 0.0
    %431 = vmatpush.msra.mxu0 0.0
    %432 = vmatpush.msra.mxu0 0.0
    %433 = vmatpush.msra.mxu0 0.0
    %434 = vmatpush.msra.mxu0 0.0
    %435 = vmatpush.msra.mxu0 0.0
    %436 = vmatpush.msra.mxu0 0.0
    %437 = vmatpush.msra.mxu0 0.0
    %438 = vmatpush.msra.mxu0 0.0
    %439 = vmatpush.msra.mxu0 0.0
    %440 = vmatpush.msra.mxu0 0.0
    %441 = vmatpush.msra.mxu0 0.0
    %442 = vmatpush.msra.mxu0 0.0
    %443 = vmatpush.msra.mxu0 %v420
    %444 = vmatpush.msra.mxu0 %v418
    %445 = vmatmul.f32.gmra.mxu0 %v424
    %v446 = vpop.f32.mrf.mxu0
    %v447 = vadd.f32 0.0, %v446
    %448 = vmatmul.f32.gmra.mxu0 %v427
    %v449 = vpop.f32.mrf.mxu0
    %v450 = vadd.f32 0.0, %v449
    %451 = vdwg.mxu0
    %s452 = scalar_lea.vmem %s9, 16
    %v453 = vld [vmem:[%s452] sm:$0xff]
    %v454 = vld [vmem:[%s452 + $0x8] sm:$0xff]
    %v456 = vsel %vm265, %v447, 0
    %v459 = vsel %vm265, %v450, 0
    %461 = vmatpush.msra.mxu0 0.0
    %462 = vmatpush.msra.mxu0 0.0
    %463 = vmatpush.msra.mxu0 0.0
    %464 = vmatpush.msra.mxu0 0.0
    %465 = vmatpush.msra.mxu0 0.0
    %466 = vmatpush.msra.mxu0 0.0
    %467 = vmatpush.msra.mxu0 0.0
    %468 = vmatpush.msra.mxu0 0.0
    %469 = vmatpush.msra.mxu0 0.0
    %470 = vmatpush.msra.mxu0 0.0
    %471 = vmatpush.msra.mxu0 0.0
    %472 = vmatpush.msra.mxu0 0.0
    %473 = vmatpush.msra.mxu0 0.0
    %474 = vmatpush.msra.mxu0 0.0
    %475 = vmatpush.msra.mxu0 %v454
    %476 = vmatpush.msra.mxu0 %v453
    %477 = vmatmul.f32.gmra.mxu0 %v456
    %v478 = vpop.f32.mrf.mxu0
    %v479 = vadd.f32 0.0, %v478
    %480 = vmatmul.f32.gmra.mxu0 %v459
    %v481 = vpop.f32.mrf.mxu0
    %v482 = vadd.f32 0.0, %v481
    %483 = vdwg.mxu0
    %v485 = vsel %vm265, %v349, 0
    %v488 = vsel %vm265, %v352, 0
    %490 = vmatpush.msra.mxu0 0.0
    %491 = vmatpush.msra.mxu0 0.0
    %492 = vmatpush.msra.mxu0 0.0
    %493 = vmatpush.msra.mxu0 0.0
    %494 = vmatpush.msra.mxu0 0.0
    %495 = vmatpush.msra.mxu0 0.0
    %496 = vmatpush.msra.mxu0 0.0
    %497 = vmatpush.msra.mxu0 0.0
    %498 = vmatpush.msra.mxu0 0.0
    %499 = vmatpush.msra.mxu0 0.0
    %500 = vmatpush.msra.mxu0 0.0
    %501 = vmatpush.msra.mxu0 0.0
    %502 = vmatpush.msra.mxu0 0.0
    %503 = vmatpush.msra.mxu0 0.0
    %504 = vmatpush.msra.mxu0 %v355
    %505 = vmatpush.msra.mxu0 %v354
    %506 = vmatmul.f32.gmra.mxu0 %v485
    %v507 = vpop.f32.mrf.mxu0
    %v508 = vadd.f32 %v479, %v507
    %509 = vmatmul.f32.gmra.mxu0 %v488
    %v510 = vpop.f32.mrf.mxu0
    %v511 = vadd.f32 %v482, %v510
    %512 = vdwg.mxu0
    %v513 = vld [vmem:[%s10] sm:$0x1]
    %v515 = vperm.slane %v513, 0
    %v517 = vadd.f32 %v508, %v515
    %v518 = vadd.f32 %v511, %v515
    %v519 = vadd.f32 %v197, %v517
    %v520 = vadd.f32 %v198, %v518
    %v521 = vld [vmem:[%s11] sm:$0x1]
    %v522 = vld [vmem:[%s12] sm:$0x1]
    %v523 = vsel %vm133, %v519, 0.0
    %524 = vadd.xlane.f32.xlu0 %v523
    %v525 = vpop.xlane.xlu0 %524
    %v526 = vsel %vm133, %v520, 0.0
    %527 = vadd.xlane.f32.xlu0 %v526
    %v528 = vpop.xlane.xlu0 %527
    %v529 = vmul.f32 %v525, %v146
    %v530 = vmul.f32 %v528, %v146
    %v531 = vmul.f32 %v519, %v519
    %v532 = vmul.f32 %v520, %v520
    %v533 = vsel %vm133, %v531, 0.0
    %534 = vadd.xlane.f32.xlu0 %v533
    %v535 = vpop.xlane.xlu0 %534
    %v536 = vsel %vm133, %v532, 0.0
    %537 = vadd.xlane.f32.xlu0 %v536
    %v538 = vpop.xlane.xlu0 %537
    %v539 = vmul.f32 %v535, %v146
    %v540 = vmul.f32 %v538, %v146
    %v541 = vmul.f32 %v529, %v529
    %v542 = vmul.f32 %v530, %v530
    %v543 = vsub.f32 %v539, %v541
    %v544 = vsub.f32 %v540, %v542
    %v545 = vsub.f32 %v519, %v529
    %v546 = vsub.f32 %v520, %v530
    %v547 = vadd.f32 %v543, 1e-12
    %v548 = vadd.f32 %v544, 1e-12
    %v549 = vrsqrt.pop %v547
    %v550 = vmul.f32 %v549, %v547
    %v551 = vmul.f32 %v550, %v549
    %v552 = vmul.f32 0.5, %v551
    %v553 = vsub.f32 1.5, %v552
    %v554 = vmul.f32 %v549, %v553
    %vm555 = vweird.f32 %v547
    %vm556 = vweird.f32 %v549
    %vm557 = vmor %vm555, %vm556
    %v558 = vsel %vm557, %v549, %v554
    %v559 = vrsqrt.pop %v548
    %v560 = vmul.f32 %v559, %v548
    %v561 = vmul.f32 %v560, %v559
    %v562 = vmul.f32 0.5, %v561
    %v563 = vsub.f32 1.5, %v562
    %v564 = vmul.f32 %v559, %v563
    %vm565 = vweird.f32 %v548
    %vm566 = vweird.f32 %v559
    %vm567 = vmor %vm565, %vm566
    %v568 = vsel %vm567, %v559, %v564
    %v569 = vmul.f32 %v545, %v558
    %v570 = vmul.f32 %v546, %v568
    %v572 = vperm.slane %v521, 0
    %v574 = vmul.f32 %v569, %v572
    %v575 = vmul.f32 %v570, %v572
    %v577 = vperm.slane %v522, 0
    %v579 = vadd.f32 %v574, %v577
    %v580 = vadd.f32 %v575, %v577
    %v581 = vld [vmem:[%s13] sm:$0xff]
    %v582 = vld [vmem:[%s13 + $0x8] sm:$0xff]
    %v583 = vld [vmem:[%s13 + $0x10] sm:$0xff]
    %v584 = vld [vmem:[%s13 + $0x18] sm:$0xff]
    %v585 = vld [vmem:[%s14] sm:$0x1]
    %v587 = vperm.slane %v585, 0
    %v590 = vsel %vm133, %v579, 0
    %v593 = vsel %vm133, %v580, 0
    %595 = vmatpush.msra.mxu0 0.0
    %596 = vmatpush.msra.mxu0 0.0
    %597 = vmatpush.msra.mxu0 0.0
    %598 = vmatpush.msra.mxu0 0.0
    %599 = vmatpush.msra.mxu0 0.0
    %600 = vmatpush.msra.mxu0 0.0
    %601 = vmatpush.msra.mxu0 0.0
    %602 = vmatpush.msra.mxu0 0.0
    %603 = vmatpush.msra.mxu0 0.0
    %604 = vmatpush.msra.mxu0 0.0
    %605 = vmatpush.msra.mxu0 0.0
    %606 = vmatpush.msra.mxu0 0.0
    %607 = vmatpush.msra.mxu0 %v584
    %608 = vmatpush.msra.mxu0 %v583
    %609 = vmatpush.msra.mxu0 %v582
    %610 = vmatpush.msra.mxu0 %v581
    %611 = vmatmul.f32.gmra.mxu0 %v590
    %v612 = vpop.f32.mrf.mxu0
    %v613 = vadd.f32 %v587, %v612
    %614 = vmatmul.f32.gmra.mxu0 %v593
    %v615 = vpop.f32.mrf.mxu0
    %v616 = vadd.f32 %v587, %v615
    %617 = vdwg.mxu0
    %v618 = vmul.f32 %v613, 0.5
    %v619 = vmul.f32 %v616, 0.5
    %v620 = vmul.f32 %v613, 0.044715
    %v621 = vmul.f32 %v616, 0.044715
    %v622 = vmul.f32 %v620, %v613
    %v623 = vmul.f32 %v621, %v616
    %v624 = vmul.f32 %v622, %v613
    %v625 = vmul.f32 %v623, %v616
    %v626 = vadd.f32 %v613, %v624
    %v627 = vadd.f32 %v616, %v625
    %v628 = vmul.f32 %v626, 0.7978846
    %v629 = vmul.f32 %v627, 0.7978846
    %v630 = vtanh.pop %v628
    %v631 = vtanh.pop %v629
    %v632 = vadd.f32 %v630, 1.0
    %v633 = vadd.f32 %v631, 1.0
    %v634 = vmul.f32 %v618, %v632
    %v635 = vmul.f32 %v619, %v633
    %v636 = vld [vmem:[%s15] sm:$0xff]
    %v637 = vld [vmem:[%s15 + $0x8] sm:$0xff]
    %v638 = vld [vmem:[%s15 + $0x10] sm:$0xff]
    %v639 = vld [vmem:[%s15 + $0x18] sm:$0xff]
    %v640 = vld [vmem:[%s15 + $0x20] sm:$0xff]
    %v641 = vld [vmem:[%s15 + $0x28] sm:$0xff]
    %v642 = vld [vmem:[%s15 + $0x30] sm:$0xff]
    %v643 = vld [vmem:[%s15 + $0x38] sm:$0xff]
    %v644 = vld [vmem:[%s16] sm:$0x1]
    %v646 = vperm.slane %v644, 0
    %vm648 = vcmask 523264
    %v650 = vsel %vm648, %v634, 0
    %v653 = vsel %vm648, %v635, 0
    %655 = vmatpush.msra.mxu0 0.0
    %656 = vmatpush.msra.mxu0 0.0
    %657 = vmatpush.msra.mxu0 0.0
    %658 = vmatpush.msra.mxu0 0.0
    %659 = vmatpush.msra.mxu0 0.0
    %660 = vmatpush.msra.mxu0 0.0
    %661 = vmatpush.msra.mxu0 0.0
    %662 = vmatpush.msra.mxu0 0.0
    %663 = vmatpush.msra.mxu0 %v643
    %664 = vmatpush.msra.mxu0 %v642
    %665 = vmatpush.msra.mxu0 %v641
    %666 = vmatpush.msra.mxu0 %v640
    %667 = vmatpush.msra.mxu0 %v639
    %668 = vmatpush.msra.mxu0 %v638
    %669 = vmatpush.msra.mxu0 %v637
    %670 = vmatpush.msra.mxu0 %v636
    %671 = vmatmul.f32.gmra.mxu0 %v650
    %v672 = vpop.f32.mrf.mxu0
    %v673 = vadd.f32 %v646, %v672
    %674 = vmatmul.f32.gmra.mxu0 %v653
    %v675 = vpop.f32.mrf.mxu0
    %v676 = vadd.f32 %v646, %v675
    %677 = vdwg.mxu0
    %v678 = vadd.f32 %v579, %v673
    %v679 = vadd.f32 %v580, %v676
    %v680 = vld [vmem:[%s17] sm:$0x1]
    %v681 = vld [vmem:[%s18] sm:$0x1]
    %v682 = vsel %vm133, %v678, 0.0
    %683 = vadd.xlane.f32.xlu0 %v682
    %v684 = vpop.xlane.xlu0 %683
    %v685 = vsel %vm133, %v679, 0.0
    %686 = vadd.xlane.f32.xlu0 %v685
    %v687 = vpop.xlane.xlu0 %686
    %v688 = vmul.f32 %v684, %v146
    %v689 = vmul.f32 %v687, %v146
    %v690 = vmul.f32 %v678, %v678
    %v691 = vmul.f32 %v679, %v679
    %v692 = vsel %vm133, %v690, 0.0
    %693 = vadd.xlane.f32.xlu0 %v692
    %v694 = vpop.xlane.xlu0 %693
    %v695 = vsel %vm133, %v691, 0.0
    %696 = vadd.xlane.f32.xlu0 %v695
    %v697 = vpop.xlane.xlu0 %696
    %v698 = vmul.f32 %v694, %v146
    %v699 = vmul.f32 %v697, %v146
    %v700 = vmul.f32 %v688, %v688
    %v701 = vmul.f32 %v689, %v689
    %v702 = vsub.f32 %v698, %v700
    %v703 = vsub.f32 %v699, %v701
    %v704 = vsub.f32 %v678, %v688
    %v705 = vsub.f32 %v679, %v689
    %v706 = vadd.f32 %v702, 1e-12
    %v707 = vadd.f32 %v703, 1e-12
    %v708 = vrsqrt.pop %v706
    %v709 = vmul.f32 %v708, %v706
    %v710 = vmul.f32 %v709, %v708
    %v711 = vmul.f32 0.5, %v710
    %v712 = vsub.f32 1.5, %v711
    %v713 = vmul.f32 %v708, %v712
    %vm714 = vweird.f32 %v706
    %vm715 = vweird.f32 %v708
    %vm716 = vmor %vm714, %vm715
    %v717 = vsel %vm716, %v708, %v713
    %v718 = vrsqrt.pop %v707
    %v719 = vmul.f32 %v718, %v707
    %v720 = vmul.f32 %v719, %v718
    %v721 = vmul.f32 0.5, %v720
    %v722 = vsub.f32 1.5, %v721
    %v723 = vmul.f32 %v718, %v722
    %vm724 = vweird.f32 %v707
    %vm725 = vweird.f32 %v718
    %vm726 = vmor %vm724, %vm725
    %v727 = vsel %vm726, %v718, %v723
    %v728 = vmul.f32 %v704, %v717
    %v729 = vmul.f32 %v705, %v727
    %v731 = vperm.slane %v680, 0
    %v733 = vmul.f32 %v728, %v731
    %v734 = vmul.f32 %v729, %v731
    %v736 = vperm.slane %v681, 0
    %v738 = vadd.f32 %v733, %v736
    %v739 = vadd.f32 %v734, %v736
    %s740 = scalar_lea.vmem %s7, 32
    %v741 = vld [vmem:[%s740] sm:$0xff]
    %v742 = vld [vmem:[%s740 + $0x8] sm:$0xff]
    %v743 = vld [vmem:[%s740 + $0x10] sm:$0xff]
    %v744 = vld [vmem:[%s740 + $0x18] sm:$0xff]
    %s745 = scalar_lea.vmem %s8, 1
    %v746 = vld [vmem:[%s745] sm:$0x1]
    %v748 = vperm.slane %v746, 0
    %v751 = vsel %vm133, %v738, 0
    %v754 = vsel %vm133, %v739, 0
    %756 = vmatpush.msra.mxu0 0.0
    %757 = vmatpush.msra.mxu0 0.0
    %758 = vmatpush.msra.mxu0 0.0
    %759 = vmatpush.msra.mxu0 0.0
    %760 = vmatpush.msra.mxu0 0.0
    %761 = vmatpush.msra.mxu0 0.0
    %762 = vmatpush.msra.mxu0 0.0
    %763 = vmatpush.msra.mxu0 0.0
    %764 = vmatpush.msra.mxu0 0.0
    %765 = vmatpush.msra.mxu0 0.0
    %766 = vmatpush.msra.mxu0 0.0
    %767 = vmatpush.msra.mxu0 0.0
    %768 = vmatpush.msra.mxu0 %v744
    %769 = vmatpush.msra.mxu0 %v743
    %770 = vmatpush.msra.mxu0 %v742
    %771 = vmatpush.msra.mxu0 %v741
    %772 = vmatmul.f32.gmra.mxu0 %v751
    %v773 = vpop.f32.mrf.mxu0
    %v774 = vadd.f32 %v748, %v773
    %775 = vmatmul.f32.gmra.mxu0 %v754
    %v776 = vpop.f32.mrf.mxu0
    %v777 = vadd.f32 %v748, %v776
    %778 = vdwg.mxu0
    %781 = vrot.lane.b32.xlu0 %v774, 96
    %v782 = vpop.permute.xlu0 %781
    %783 = vrot.lane.b32.xlu0 %v777, 96
    %v784 = vpop.permute.xlu0 %783
    %v785 = vsel %vm265, %v774, 0
    %v787 = vsel %vm265, %v777, 0
    %v789 = vsel %vm265, %v782, 0
    %v791 = vsel %vm265, %v784, 0
    %793 = vmatpush.xpose.msra.mxu0 0.0
    %794 = vmatpush.xpose.msra.mxu0 0.0
    %795 = vmatpush.xpose.msra.mxu0 0.0
    %796 = vmatpush.xpose.msra.mxu0 0.0
    %797 = vmatpush.xpose.msra.mxu0 0.0
    %798 = vmatpush.xpose.msra.mxu0 0.0
    %799 = vmatpush.xpose.msra.mxu0 0.0
    %800 = vmatpush.xpose.msra.mxu0 0.0
    %801 = vmatpush.xpose.msra.mxu0 0.0
    %802 = vmatpush.xpose.msra.mxu0 0.0
    %803 = vmatpush.xpose.msra.mxu0 0.0
    %804 = vmatpush.xpose.msra.mxu0 0.0
    %805 = vmatpush.xpose.msra.mxu0 0.0
    %806 = vmatpush.xpose.msra.mxu0 0.0
    %807 = vmatpush.xpose.msra.mxu0 %v791
    %808 = vmatpush.xpose.msra.mxu0 %v789
    %809 = vmatmul.f32.gmra.mxu0 %v785
    %v810 = vpop.f32.mrf.mxu0
    %v811 = vadd.f32 %v220, %v810
    %812 = vmatmul.f32.gmra.mxu0 %v787
    %v813 = vpop.f32.mrf.mxu0
    %v814 = vadd.f32 %v221, %v813
    %815 = vdwg.mxu0
    %v816 = vsel %vm265, %v811, -inf
    %817 = vmax.xlane.f32.xlu0 %v816
    %v818 = vpop.xlane.xlu0 %817
    %v819 = vsel %vm265, %v814, -inf
    %820 = vmax.xlane.f32.xlu0 %v819
    %v821 = vpop.xlane.xlu0 %820
    %v822 = vsub.f32 %v811, %v818
    %v823 = vsub.f32 %v814, %v821
    %v824 = vmul.f32 %v822, 1.442695
    %v825 = vpow.pop %v824
    %v826 = vmul.f32 %v823, 1.442695
    %v827 = vpow.pop %v826
    %v828 = vsel %vm265, %v825, 0.0
    %829 = vadd.xlane.f32.xlu0 %v828
    %v830 = vpop.xlane.xlu0 %829
    %v831 = vsel %vm265, %v827, 0.0
    %832 = vadd.xlane.f32.xlu0 %v831
    %v833 = vpop.xlane.xlu0 %832
    %v834 = vrcp.pop %v830
    %v835 = vrcp.pop %v833
    %v836 = vmul.f32 %v825, %v834
    %v837 = vmul.f32 %v827, %v835
    %838 = vrot.lane.b32.xlu0 %v774, 64
    %v839 = vpop.permute.xlu0 %838
    %840 = vrot.lane.b32.xlu0 %v777, 64
    %v841 = vpop.permute.xlu0 %840
    %v845 = vsel %vm265, %v836, 0
    %v848 = vsel %vm265, %v837, 0
    %850 = vmatpush.msra.mxu0 0.0
    %851 = vmatpush.msra.mxu0 0.0
    %852 = vmatpush.msra.mxu0 0.0
    %853 = vmatpush.msra.mxu0 0.0
    %854 = vmatpush.msra.mxu0 0.0
    %855 = vmatpush.msra.mxu0 0.0
    %856 = vmatpush.msra.mxu0 0.0
    %857 = vmatpush.msra.mxu0 0.0
    %858 = vmatpush.msra.mxu0 0.0
    %859 = vmatpush.msra.mxu0 0.0
    %860 = vmatpush.msra.mxu0 0.0
    %861 = vmatpush.msra.mxu0 0.0
    %862 = vmatpush.msra.mxu0 0.0
    %863 = vmatpush.msra.mxu0 0.0
    %864 = vmatpush.msra.mxu0 %v841
    %865 = vmatpush.msra.mxu0 %v839
    %866 = vmatmul.f32.gmra.mxu0 %v845
    %v867 = vpop.f32.mrf.mxu0
    %v868 = vadd.f32 0.0, %v867
    %869 = vmatmul.f32.gmra.mxu0 %v848
    %v870 = vpop.f32.mrf.mxu0
    %v871 = vadd.f32 0.0, %v870
    %872 = vdwg.mxu0
    %s873 = scalar_lea.vmem %s9, 32
    %v874 = vld [vmem:[%s873] sm:$0xff]
    %v875 = vld [vmem:[%s873 + $0x8] sm:$0xff]
    %876 = vrot.lane.b32.xlu0 %v774, 112
    %v877 = vpop.permute.xlu0 %876
    %878 = vrot.lane.b32.xlu0 %v777, 112
    %v879 = vpop.permute.xlu0 %878
    %880 = vrot.lane.b32.xlu0 %v774, 80
    %v881 = vpop.permute.xlu0 %880
    %882 = vrot.lane.b32.xlu0 %v777, 80
    %v883 = vpop.permute.xlu0 %882
    %v884 = vsel %vm265, %v877, 0
    %v886 = vsel %vm265, %v879, 0
    %v888 = vsel %vm265, %v881, 0
    %v890 = vsel %vm265, %v883, 0
    %892 = vmatpush.xpose.msra.mxu0 0.0
    %893 = vmatpush.xpose.msra.mxu0 0.0
    %894 = vmatpush.xpose.msra.mxu0 0.0
    %895 = vmatpush.xpose.msra.mxu0 0.0
    %896 = vmatpush.xpose.msra.mxu0 0.0
    %897 = vmatpush.xpose.msra.mxu0 0.0
    %898 = vmatpush.xpose.msra.mxu0 0.0
    %899 = vmatpush.xpose.msra.mxu0 0.0
    %900 = vmatpush.xpose.msra.mxu0 0.0
    %901 = vmatpush.xpose.msra.mxu0 0.0
    %902 = vmatpush.xpose.msra.mxu0 0.0
    %903 = vmatpush.xpose.msra.mxu0 0.0
    %904 = vmatpush.xpose.msra.mxu0 0.0
    %905 = vmatpush.xpose.msra.mxu0 0.0
    %906 = vmatpush.xpose.msra.mxu0 %v890
    %907 = vmatpush.xpose.msra.mxu0 %v888
    %908 = vmatmul.f32.gmra.mxu0 %v884
    %v909 = vpop.f32.mrf.mxu0
    %v910 = vadd.f32 %v220, %v909
    %911 = vmatmul.f32.gmra.mxu0 %v886
    %v912 = vpop.f32.mrf.mxu0
    %v913 = vadd.f32 %v221, %v912
    %914 = vdwg.mxu0
    %v915 = vsel %vm265, %v910, -inf
    %916 = vmax.xlane.f32.xlu0 %v915
    %v917 = vpop.xlane.xlu0 %916
    %v918 = vsel %vm265, %v913, -inf
    %919 = vmax.xlane.f32.xlu0 %v918
    %v920 = vpop.xlane.xlu0 %919
    %v921 = vsub.f32 %v910, %v917
    %v922 = vsub.f32 %v913, %v920
    %v923 = vmul.f32 %v921, 1.442695
    %v924 = vpow.pop %v923
    %v925 = vmul.f32 %v922, 1.442695
    %v926 = vpow.pop %v925
    %v927 = vsel %vm265, %v924, 0.0
    %928 = vadd.xlane.f32.xlu0 %v927
    %v929 = vpop.xlane.xlu0 %928
    %v930 = vsel %vm265, %v926, 0.0
    %931 = vadd.xlane.f32.xlu0 %v930
    %v932 = vpop.xlane.xlu0 %931
    %v933 = vrcp.pop %v929
    %v934 = vrcp.pop %v932
    %v935 = vmul.f32 %v924, %v933
    %v936 = vmul.f32 %v926, %v934
    %937 = vrot.lane.b32.xlu0 %v774, 48
    %v938 = vpop.permute.xlu0 %937
    %939 = vrot.lane.b32.xlu0 %v777, 48
    %v940 = vpop.permute.xlu0 %939
    %v944 = vsel %vm265, %v935, 0
    %v947 = vsel %vm265, %v936, 0
    %949 = vmatpush.msra.mxu0 0.0
    %950 = vmatpush.msra.mxu0 0.0
    %951 = vmatpush.msra.mxu0 0.0
    %952 = vmatpush.msra.mxu0 0.0
    %953 = vmatpush.msra.mxu0 0.0
    %954 = vmatpush.msra.mxu0 0.0
    %955 = vmatpush.msra.mxu0 0.0
    %956 = vmatpush.msra.mxu0 0.0
    %957 = vmatpush.msra.mxu0 0.0
    %958 = vmatpush.msra.mxu0 0.0
    %959 = vmatpush.msra.mxu0 0.0
    %960 = vmatpush.msra.mxu0 0.0
    %961 = vmatpush.msra.mxu0 0.0
    %962 = vmatpush.msra.mxu0 0.0
    %963 = vmatpush.msra.mxu0 %v940
    %964 = vmatpush.msra.mxu0 %v938
    %965 = vmatmul.f32.gmra.mxu0 %v944
    %v966 = vpop.f32.mrf.mxu0
    %v967 = vadd.f32 0.0, %v966
    %968 = vmatmul.f32.gmra.mxu0 %v947
    %v969 = vpop.f32.mrf.mxu0
    %v970 = vadd.f32 0.0, %v969
    %971 = vdwg.mxu0
    %s972 = scalar_lea.vmem %s9, 48
    %v973 = vld [vmem:[%s972] sm:$0xff]
    %v974 = vld [vmem:[%s972 + $0x8] sm:$0xff]
    %v976 = vsel %vm265, %v967, 0
    %v979 = vsel %vm265, %v970, 0
    %981 = vmatpush.msra.mxu0 0.0
    %982 = vmatpush.msra.mxu0 0.0
    %983 = vmatpush.msra.mxu0 0.0
    %984 = vmatpush.msra.mxu0 0.0
    %985 = vmatpush.msra.mxu0 0.0
    %986 = vmatpush.msra.mxu0 0.0
    %987 = vmatpush.msra.mxu0 0.0
    %988 = vmatpush.msra.mxu0 0.0
    %989 = vmatpush.msra.mxu0 0.0
    %990 = vmatpush.msra.mxu0 0.0
    %991 = vmatpush.msra.mxu0 0.0
    %992 = vmatpush.msra.mxu0 0.0
    %993 = vmatpush.msra.mxu0 0.0
    %994 = vmatpush.msra.mxu0 0.0
    %995 = vmatpush.msra.mxu0 %v974
    %996 = vmatpush.msra.mxu0 %v973
    %997 = vmatmul.f32.gmra.mxu0 %v976
    %v998 = vpop.f32.mrf.mxu0
    %v999 = vadd.f32 0.0, %v998
    %1000 = vmatmul.f32.gmra.mxu0 %v979
    %v1001 = vpop.f32.mrf.mxu0
    %v1002 = vadd.f32 0.0, %v1001
    %1003 = vdwg.mxu0
    %v1005 = vsel %vm265, %v868, 0
    %v1008 = vsel %vm265, %v871, 0
    %1010 = vmatpush.msra.mxu0 0.0
    %1011 = vmatpush.msra.mxu0 0.0
    %1012 = vmatpush.msra.mxu0 0.0
    %1013 = vmatpush.msra.mxu0 0.0
    %1014 = vmatpush.msra.mxu0 0.0
    %1015 = vmatpush.msra.mxu0 0.0
    %1016 = vmatpush.msra.mxu0 0.0
    %1017 = vmatpush.msra.mxu0 0.0
    %1018 = vmatpush.msra.mxu0 0.0
    %1019 = vmatpush.msra.mxu0 0.0
    %1020 = vmatpush.msra.mxu0 0.0
    %1021 = vmatpush.msra.mxu0 0.0
    %1022 = vmatpush.msra.mxu0 0.0
    %1023 = vmatpush.msra.mxu0 0.0
    %1024 = vmatpush.msra.mxu0 %v875
    %1025 = vmatpush.msra.mxu0 %v874
    %1026 = vmatmul.f32.gmra.mxu0 %v1005
    %v1027 = vpop.f32.mrf.mxu0
    %v1028 = vadd.f32 %v999, %v1027
    %1029 = vmatmul.f32.gmra.mxu0 %v1008
    %v1030 = vpop.f32.mrf.mxu0
    %v1031 = vadd.f32 %v1002, %v1030
    %1032 = vdwg.mxu0
    %s1033 = scalar_lea.vmem %s10, 1
    %v1034 = vld [vmem:[%s1033] sm:$0x1]
    %v1036 = vperm.slane %v1034, 0
    %v1038 = vadd.f32 %v1028, %v1036
    %v1039 = vadd.f32 %v1031, %v1036
    %v1040 = vadd.f32 %v738, %v1038
    %v1041 = vadd.f32 %v739, %v1039
    %s1042 = scalar_lea.vmem %s11, 1
    %v1043 = vld [vmem:[%s1042] sm:$0x1]
    %s1044 = scalar_lea.vmem %s12, 1
    %v1045 = vld [vmem:[%s1044] sm:$0x1]
    %v1048 = vrot.slane %v1041, 7
    %vm1049 = vcmask 1041409
    %v1050 = vsel %vm1049, %v1048, %v1040
    %vm1052 = vcmask 254976
    %v1053 = vsel %vm1052, %v1050, 0.0
    %1054 = vadd.xlane.f32.xlu0 %v1053
    %v1055 = vpop.xlane.xlu0 %1054
    %v1056 = vmul.f32 %v1055, %v146
    %v1057 = vmul.f32 %v1040, %v1040
    %v1058 = vmul.f32 %v1041, %v1041
    %v1061 = vrot.slane %v1058, 7
    %v1062 = vsel %vm1049, %v1061, %v1057
    %v1064 = vsel %vm1052, %v1062, 0.0
    %1065 = vadd.xlane.f32.xlu0 %v1064
    %v1066 = vpop.xlane.xlu0 %1065
    %v1067 = vmul.f32 %v1066, %v146
    %v1068 = vmul.f32 %v1056, %v1056
    %v1069 = vsub.f32 %v1067, %v1068
    %v1071 = vrot.slane %v1056, 1
    %v1074 = vsub.f32 %v1040, %v1056
    %v1075 = vsub.f32 %v1041, %v1071
    %v1076 = vadd.f32 %v1069, 1e-12
    %v1077 = vrsqrt.pop %v1076
    %v1078 = vmul.f32 %v1077, %v1076
    %v1079 = vmul.f32 %v1078, %v1077
    %v1080 = vmul.f32 0.5, %v1079
    %v1081 = vsub.f32 1.5, %v1080
    %v1082 = vmul.f32 %v1077, %v1081
    %vm1083 = vweird.f32 %v1076
    %vm1084 = vweird.f32 %v1077
    %vm1085 = vmor %vm1083, %vm1084
    %v1086 = vsel %vm1085, %v1077, %v1082
    %v1088 = vrot.slane %v1086, 1
    %v1091 = vmul.f32 %v1074, %v1086
    %v1092 = vmul.f32 %v1075, %v1088
    %v1094 = vperm.slane %v1043, 0
    %v1096 = vmul.f32 %v1091, %v1094
    %v1097 = vmul.f32 %v1092, %v1094
    %v1099 = vperm.slane %v1045, 0
    %v1101 = vadd.f32 %v1096, %v1099
    %v1102 = vadd.f32 %v1097, %v1099
    %s1103 = scalar_lea.vmem %s13, 32
    %v1104 = vld [vmem:[%s1103] sm:$0xff]
    %v1105 = vld [vmem:[%s1103 + $0x8] sm:$0xff]
    %v1106 = vld [vmem:[%s1103 + $0x10] sm:$0xff]
    %v1107 = vld [vmem:[%s1103 + $0x18] sm:$0xff]
    %s1108 = scalar_lea.vmem %s14, 1
    %v1109 = vld [vmem:[%s1108] sm:$0x1]
    %v1111 = vperm.slane %v1109, 0
    %v1115 = vrot.slane %v1102, 7
    %v1116 = vsel %vm1049, %v1115, %v1101
    %v1117 = vsel %vm133, %v1116, 0
    %1119 = vmatpush.msra.mxu0 0.0
    %1120 = vmatpush.msra.mxu0 0.0
    %1121 = vmatpush.msra.mxu0 0.0
    %1122 = vmatpush.msra.mxu0 0.0
    %1123 = vmatpush.msra.mxu0 0.0
    %1124 = vmatpush.msra.mxu0 0.0
    %1125 = vmatpush.msra.mxu0 0.0
    %1126 = vmatpush.msra.mxu0 0.0
    %1127 = vmatpush.msra.mxu0 0.0
    %1128 = vmatpush.msra.mxu0 0.0
    %1129 = vmatpush.msra.mxu0 0.0
    %1130 = vmatpush.msra.mxu0 0.0
    %1131 = vmatpush.msra.mxu0 %v1107
    %1132 = vmatpush.msra.mxu0 %v1106
    %1133 = vmatpush.msra.mxu0 %v1105
    %1134 = vmatpush.msra.mxu0 %v1104
    %1135 = vmatmul.f32.gmra.mxu0 %v1117
    %v1136 = vpop.f32.mrf.mxu0
    %v1137 = vadd.f32 %v1111, %v1136
    %1138 = vdwg.mxu0
    %v1139 = vmul.f32 %v1137, 0.5
    %v1140 = vmul.f32 %v1137, 0.044715
    %v1141 = vmul.f32 %v1140, %v1137
    %v1142 = vmul.f32 %v1141, %v1137
    %v1143 = vadd.f32 %v1137, %v1142
    %v1144 = vmul.f32 %v1143, 0.7978846
    %v1145 = vtanh.pop %v1144
    %v1146 = vadd.f32 %v1145, 1.0
    %v1147 = vmul.f32 %v1139, %v1146
    %s1148 = scalar_lea.vmem %s15, 64
    %v1149 = vld [vmem:[%s1148] sm:$0xff]
    %v1150 = vld [vmem:[%s1148 + $0x8] sm:$0xff]
    %v1151 = vld [vmem:[%s1148 + $0x10] sm:$0xff]
    %v1152 = vld [vmem:[%s1148 + $0x18] sm:$0xff]
    %v1153 = vld [vmem:[%s1148 + $0x20] sm:$0xff]
    %v1154 = vld [vmem:[%s1148 + $0x28] sm:$0xff]
    %v1155 = vld [vmem:[%s1148 + $0x30] sm:$0xff]
    %v1156 = vld [vmem:[%s1148 + $0x38] sm:$0xff]
    %s1157 = scalar_lea.vmem %s16, 1
    %v1158 = vld [vmem:[%s1157] sm:$0x1]
    %v1160 = vperm.slane %v1158, 0
    %v1163 = vsel %vm648, %v1147, 0
    %1165 = vmatpush.msra.mxu0 0.0
    %1166 = vmatpush.msra.mxu0 0.0
    %1167 = vmatpush.msra.mxu0 0.0
    %1168 = vmatpush.msra.mxu0 0.0
    %1169 = vmatpush.msra.mxu0 0.0
    %1170 = vmatpush.msra.mxu0 0.0
    %1171 = vmatpush.msra.mxu0 0.0
    %1172 = vmatpush.msra.mxu0 0.0
    %1173 = vmatpush.msra.mxu0 %v1156
    %1174 = vmatpush.msra.mxu0 %v1155
    %1175 = vmatpush.msra.mxu0 %v1154
    %1176 = vmatpush.msra.mxu0 %v1153
    %1177 = vmatpush.msra.mxu0 %v1152
    %1178 = vmatpush.msra.mxu0 %v1151
    %1179 = vmatpush.msra.mxu0 %v1150
    %1180 = vmatpush.msra.mxu0 %v1149
    %1181 = vmatmul.f32.gmra.mxu0 %v1163
    %v1182 = vpop.f32.mrf.mxu0
    %v1183 = vadd.f32 %v1160, %v1182
    %1184 = vdwg.mxu0
    %v1186 = vrot.slane %v1183, 1
    %v1189 = vadd.f32 %v1101, %v1183
    %v1190 = vadd.f32 %v1102, %v1186
    %s1191 = scalar_lea.vmem %s17, 1
    %v1192 = vld [vmem:[%s1191] sm:$0x1]
    %s1193 = scalar_lea.vmem %s18, 1
    %v1194 = vld [vmem:[%s1193] sm:$0x1]
    %v1197 = vrot.slane %v1190, 7
    %v1198 = vsel %vm1049, %v1197, %v1189
    %v1200 = vsel %vm1052, %v1198, 0.0
    %1201 = vadd.xlane.f32.xlu0 %v1200
    %v1202 = vpop.xlane.xlu0 %1201
    %v1203 = vmul.f32 %v1202, %v146
    %v1204 = vmul.f32 %v1189, %v1189
    %v1205 = vmul.f32 %v1190, %v1190
    %v1208 = vrot.slane %v1205, 7
    %v1209 = vsel %vm1049, %v1208, %v1204
    %v1211 = vsel %vm1052, %v1209, 0.0
    %1212 = vadd.xlane.f32.xlu0 %v1211
    %v1213 = vpop.xlane.xlu0 %1212
    %v1214 = vmul.f32 %v1213, %v146
    %v1215 = vmul.f32 %v1203, %v1203
    %v1216 = vsub.f32 %v1214, %v1215
    %v1218 = vrot.slane %v1203, 1
    %v1221 = vsub.f32 %v1189, %v1203
    %v1222 = vsub.f32 %v1190, %v1218
    %v1223 = vadd.f32 %v1216, 1e-12
    %v1224 = vrsqrt.pop %v1223
    %v1225 = vmul.f32 %v1224, %v1223
    %v1226 = vmul.f32 %v1225, %v1224
    %v1227 = vmul.f32 0.5, %v1226
    %v1228 = vsub.f32 1.5, %v1227
    %v1229 = vmul.f32 %v1224, %v1228
    %vm1230 = vweird.f32 %v1223
    %vm1231 = vweird.f32 %v1224
    %vm1232 = vmor %vm1230, %vm1231
    %v1233 = vsel %vm1232, %v1224, %v1229
    %v1235 = vrot.slane %v1233, 1
    %v1238 = vmul.f32 %v1221, %v1233
    %v1239 = vmul.f32 %v1222, %v1235
    %v1241 = vperm.slane %v1192, 0
    %v1243 = vmul.f32 %v1238, %v1241
    %v1244 = vmul.f32 %v1239, %v1241
    %v1246 = vperm.slane %v1194, 0
    %v1248 = vadd.f32 %v1243, %v1246
    %v1249 = vadd.f32 %v1244, %v1246
    %v1250 = vld [vmem:[%s19] sm:$0xff]
    %v1251 = vld [vmem:[%s19 + $0x8] sm:$0xff]
    %v1252 = vld [vmem:[%s19 + $0x10] sm:$0xff]
    %v1253 = vld [vmem:[%s19 + $0x18] sm:$0xff]
    %v1254 = vld [vmem:[%s20] sm:$0x1]
    %v1256 = vperm.slane %v1254, 0
    %v1260 = vrot.slane %v1249, 7
    %v1261 = vsel %vm1049, %v1260, %v1248
    %v1262 = vsel %vm133, %v1261, 0
    %1264 = vmatpush.msra.mxu0 0.0
    %1265 = vmatpush.msra.mxu0 0.0
    %1266 = vmatpush.msra.mxu0 0.0
    %1267 = vmatpush.msra.mxu0 0.0
    %1268 = vmatpush.msra.mxu0 0.0
    %1269 = vmatpush.msra.mxu0 0.0
    %1270 = vmatpush.msra.mxu0 0.0
    %1271 = vmatpush.msra.mxu0 0.0
    %1272 = vmatpush.msra.mxu0 0.0
    %1273 = vmatpush.msra.mxu0 0.0
    %1274 = vmatpush.msra.mxu0 0.0
    %1275 = vmatpush.msra.mxu0 0.0
    %1276 = vmatpush.msra.mxu0 %v1253
    %1277 = vmatpush.msra.mxu0 %v1252
    %1278 = vmatpush.msra.mxu0 %v1251
    %1279 = vmatpush.msra.mxu0 %v1250
    %1280 = vmatmul.f32.gmra.mxu0 %v1262
    %v1281 = vpop.f32.mrf.mxu0
    %v1282 = vadd.f32 %v1256, %v1281
    %1283 = vdwg.mxu0
    %vm1284 = vcmask 17408
    %1285 = vst.msk [vmem:[#allocation2] sm:$0x3] %vm1284, %v1282
    // Predicated region
    $region86: #{emotion_bert_forward.1} parent=1 // pred_check
      _
    $region87: #{emotion_bert_forward.1} parent=1 // pred_check_branch
      %1287 = sbr.rel (0) target = $region89
    $region88: #{emotion_bert_forward.1} parent=1 // pred_region
      %1289 = vsyncadd [#allocation3], 0
      %s1291 = sshll.u32 [#allocation2], 4
      %s1292 = int_to_ptr.vmem [resolvable:$true] %s1291
      %s1293 = sshll.u32 %s21, 4
      %s1294 = int_to_ptr.hbm [resolvable:$true] %s1293
      %1296 = dma.vmem_to_hbm [thread:$0]  %s1292, 32, %s1294, [#allocation3]
    $region89: #{emotion_bert_forward.1} parent=1 // pred_fallthru
      _
    // Predicated region
    $region90: #{emotion_bert_forward.1} parent=1 // pred_check
      _
    $region91: #{emotion_bert_forward.1} parent=1 // pred_check_branch
      %1298 = sbr.rel (0) target = $region93
    $region92: #{emotion_bert_forward.1} parent=1 // pred_region
      %1300 = dma.done [#allocation3], 32
    $region93: #{emotion_bert_forward.1} parent=1 // pred_fallthru
      _
    %1301 = vsyncpa [#allocation3], 1

</llo_original>
